<compile_context>
chip_gen: v6e
topology: v6e:2x2x1
jax: 0.10.0
libtpu: 0.0.40
codegen_flags: <defaults>
</compile_context>

<pallas_src>
from functools import partial

import jax
import jax.numpy as jnp
from jax.experimental import pallas as pl
from jax.experimental.pallas import tpu as pltpu

EMBED_DIM = 527   # PANNs embedding width (AudioSet class count)
K_PAD = 640       # round_up(527, 128) — lane-aligned embedding width
C_PAD = 128       # lane-dense head output width (class_num padded to 128)


def _round_up(x, m):
    return ((x + m - 1) // m) * m


def _pick_tk_and_vmem_limit():
    """Per-generation reduction tile + scoped-VMEM limit.

    Double-buffered proj chunk costs 2*tk*K_PAD*2 bytes (bf16):
      tk=4096 -> ~10 MiB  (fits every generation's default scoped VMEM)
      tk=8192 -> ~21 MiB  (fits v6e/v7x defaults; needs a raised limit on v5e)
    """
    tk, vmem_limit = 4096, 32 * 1024 * 1024
    try:
        cap = getattr(pltpu.get_tpu_info(), "vmem_capacity_bytes", 0)
        if cap >= 96 * 1024 * 1024:          # v5e / v6e: 128 MiB physical VMEM
            tk, vmem_limit = 8192, 48 * 1024 * 1024
    except Exception:
        pass                                  # conservative defaults fit all gens
    return tk, vmem_limit


def _tiling(n_samples):
    """Pick the k-tile and the padded contraction length for a given N."""
    tk_target, vmem_limit = _pick_tk_and_vmem_limit()
    tk = min(tk_target, _round_up(n_samples, 512))
    nk = pl.cdiv(n_samples, tk)
    n_pad = nk * tk
    return tk, nk, n_pad, vmem_limit


def _pad_batch(b):
    b_padded = _round_up(max(b, 1), 16)      # 16 rows = one packed bf16 vreg
    if b_padded > 128:
        b_padded = _round_up(b_padded, 128)  # keep batch tiles of 128
    return b_padded


# ----------------------------------------------------------------------------
# Fused kernel:  out = sigmoid( (audio @ proj) @ W_t + b )
#   grid axis 0 = batch tiles ("parallel"), grid axis 1 = reduction over
#   n_samples ("arbitrary") with an f32 VMEM accumulator.
# ----------------------------------------------------------------------------
def _fused_panns_head_kernel(audio_ref, proj_ref, w_ref, b_ref, out_ref, acc_ref):
    # audio_ref: (bm, tk)        bf16  VMEM (k-th chunk of raw audio)
    # proj_ref:  (tk, K_PAD)     bf16  VMEM (k-th chunk of stand-in backbone)
    # w_ref:     (K_PAD, C_PAD)  bf16  VMEM (pre-transposed, pre-padded head W)
    # b_ref:     (1, C_PAD)      f32   VMEM
    # out_ref:   (bm, C_PAD)     f32   VMEM (lane-dense)
    # acc_ref:   (bm, K_PAD)     f32   VMEM scratch (embedding accumulator)
    k = pl.program_id(1)

    @pl.when(k == 0)
    def _():
        acc_ref[...] = jnp.zeros_like(acc_ref)

    # Producer matmul chunk: bf16 operands, f32 accumulation on the MXU.
    acc_ref[...] += jnp.dot(audio_ref[...], proj_ref[...],
                            preferred_element_type=jnp.float32)

    @pl.when(k == pl.num_programs(1) - 1)
    def _():
        # Head: Linear(527, class_num) + sigmoid (bf16 operands, f32 result).
        logits = jnp.dot(acc_ref[...].astype(jnp.bfloat16), w_ref[...],
                         preferred_element_type=jnp.float32)
        logits = logits + b_ref[...]                      # (1, C_PAD) broadcast
        out_ref[...] = jax.nn.sigmoid(logits).astype(out_ref.dtype)


@partial(jax.jit, static_argnames=("class_num", "batch"))
def finetune_panns_forward(audio_p, proj_pad, w_pad, bias_pad, *, class_num, batch):
    """sigmoid((audio @ proj) @ W_t + b) in one fused Pallas call.

    audio_p:  (B_pad, N_pad) bfloat16  pre-padded / pre-cast raw audio
    proj_pad: (N_pad, K_PAD) bfloat16  stand-in backbone, zero-padded
    w_pad:    (K_PAD, C_PAD) bfloat16  head weight, pre-transposed + zero-padded
    bias_pad: (1, C_PAD)     float32   head bias, zero-padded
    returns   (batch, class_num) float32
    """
    B_pad, N_pad = audio_p.shape
    K_pad = proj_pad.shape[1]
    C_pad = w_pad.shape[1]
    assert proj_pad.shape[0] == N_pad and N_pad % 512 == 0

    tk_target, vmem_limit = _pick_tk_and_vmem_limit()
    tk = min(tk_target, N_pad)
    nk = N_pad // tk

    bm = 128 if B_pad > 128 else B_pad        # single batch tile for small B
    nb = B_pad // bm

    out = pl.pallas_call(
        _fused_panns_head_kernel,
        out_shape=jax.ShapeDtypeStruct((B_pad, C_pad), jnp.float32),
        grid_spec=pltpu.PrefetchScalarGridSpec(
            num_scalar_prefetch=0,
            grid=(nb, nk),
            in_specs=[
                pl.BlockSpec((bm, tk), lambda b, k: (b, k)),      # audio chunk
                pl.BlockSpec((tk, K_pad), lambda b, k: (k, 0)),   # proj chunk
                pl.BlockSpec((K_pad, C_pad), lambda b, k: (0, 0)),  # head W (resident)
                pl.BlockSpec((1, C_pad), lambda b, k: (0, 0)),      # head b (resident)
            ],
            out_specs=pl.BlockSpec((bm, C_pad), lambda b, k: (b, 0)),
            scratch_shapes=[pltpu.VMEM((bm, K_pad), jnp.float32)],
        ),
        compiler_params=pltpu.CompilerParams(
            dimension_semantics=("parallel", "arbitrary"),
            vmem_limit_bytes=vmem_limit,
        ),
    )(audio_p, proj_pad, w_pad, bias_pad)

    # Slice away batch / class padding (padded class cols hold sigmoid(0)=0.5).
    return out[:batch, :class_num]


# ----------------------------------------------------------------------------
# One-time preparation (outside the per-step hot path)
# ----------------------------------------------------------------------------
def prepare_audio(audio, n_pad, b_padded):
    """Zero-pad and bf16-cast raw audio once, outside the hot path."""
    B, N = audio.shape
    out = jnp.zeros((b_padded, n_pad), jnp.bfloat16)
    return out.at[:B, :N].set(audio.astype(jnp.bfloat16))


def init_head_params(key, class_num, in_features=EMBED_DIM):
    """xavier_uniform_ weight, zero bias (as in init_layer), stored pre-transposed
    (527, class_num), zero-padded to (K_PAD, C_PAD) and cast to bf16."""
    bound = float(jnp.sqrt(6.0 / (in_features + class_num)))
    # xavier_uniform is symmetric -> sampling the transposed layout directly is
    # distributionally identical to transposing an (out, in) sample.
    w_t = jax.random.uniform(key, (in_features, class_num),
                             minval=-bound, maxval=bound, dtype=jnp.float32)
    bias = jnp.zeros((class_num,), dtype=jnp.float32)

    w_pad = jnp.zeros((K_PAD, C_PAD), jnp.bfloat16)
    w_pad = w_pad.at[:in_features, :class_num].set(w_t.astype(jnp.bfloat16))
    bias_pad = jnp.zeros((1, C_PAD), jnp.float32).at[0, :class_num].set(bias)
    return (w_pad, bias_pad), (w_t, bias)


def init_fake_panns(key, n_samples, n_pad, embed_dim=EMBED_DIM):
    # TODO(synk): real PANNs backbone unavailable; deterministic projection stand-in.
    proj = jax.random.normal(key, (n_samples, embed_dim), dtype=jnp.float32)
    proj = proj / jnp.sqrt(jnp.float32(n_samples))
    proj_pad = jnp.zeros((n_pad, K_PAD), jnp.bfloat16)
    proj_pad = proj_pad.at[:n_samples, :embed_dim].set(proj.astype(jnp.bfloat16))
    return proj_pad, proj


if __name__ == "__main__":
    key = jax.random.PRNGKey(0)
    k_audio, k_proj, k_w = jax.random.split(key, 3)

    B = 2
    N_SAMPLES = 1024          # raw-audio length for the stand-in backbone
    CLASS_NUM = 10

    # Raw audio input (what the PyTorch module's forward receives).
    audio = jax.random.normal(k_audio, (B, N_SAMPLES), dtype=jnp.float32)

    # Tiling / padding derived once, outside the hot path.
    _tk, _nk, n_pad, _vmem = _tiling(N_SAMPLES)
    b_padded = _pad_batch(B)

    # Stand-in PANNs backbone + fine-tune head parameters (pre-padded/transposed).
    proj_pad, proj_f32 = init_fake_panns(k_proj, N_SAMPLES, n_pad)
    (w_pad, bias_pad), (w_t, bias) = init_head_params(k_w, CLASS_NUM)
    audio_p = prepare_audio(audio, n_pad, b_padded)

    # Fused forward: embedding matmul + Linear(527, class_num) + sigmoid.
    clipwise_output = finetune_panns_forward(audio_p, proj_pad, w_pad, bias_pad,
                                             class_num=CLASS_NUM, batch=B)
    clipwise_output = jax.block_until_ready(clipwise_output)

    # Reference (plain JAX) at matching precision: bf16 producer operands and
    # bf16 head operands, f32 accumulation.
    embed_ref = jnp.dot(audio.astype(jnp.bfloat16), proj_f32.astype(jnp.bfloat16),
                        preferred_element_type=jnp.float32)
    logits_ref = jnp.dot(embed_ref.astype(jnp.bfloat16), w_t.astype(jnp.bfloat16),
                         preferred_element_type=jnp.float32) + bias
    ref = jax.nn.sigmoid(logits_ref)

    assert clipwise_output.shape == (B, CLASS_NUM)
    err = float(jnp.max(jnp.abs(clipwise_output - ref)))
    assert jnp.allclose(clipwise_output, ref, atol=2e-3, rtol=2e-3), err

    print("KERNEL_OK")
</pallas_src>

<mosaic_0001>
module attributes {stable_mosaic.version = 11 : i64} {
  func.func @_fused_panns_head_kernel(%arg0: i32, %arg1: i32, %arg2: memref<16x1024xbf16, #tpu.memory_space<vmem>>, %arg3: memref<1024x640xbf16, #tpu.memory_space<vmem>>, %arg4: memref<640x128xbf16, #tpu.memory_space<vmem>>, %arg5: memref<1x128xf32, #tpu.memory_space<vmem>>, %arg6: memref<16x128xf32, #tpu.memory_space<vmem>>, %arg7: memref<16x640xf32, #tpu.memory_space<vmem>>) attributes {dimension_semantics = [#tpu.dimension_semantics<parallel>, #tpu.dimension_semantics<arbitrary>], iteration_bounds = array<i64: 1, 1>, scalar_prefetch = 0 : i64, scratch_operands = 1 : i64, tpu.core_type = #tpu.core_type<tc>, window_params = [{transform_indices = @transform_0, window_bounds = array<i64: 16, 1024>}, {transform_indices = @transform_1, window_bounds = array<i64: 1024, 640>}, {pipeline_mode = #tpu.pipeline_mode<synchronous>, transform_indices = @transform_2, window_bounds = array<i64: 640, 128>}, {pipeline_mode = #tpu.pipeline_mode<synchronous>, transform_indices = @transform_3, window_bounds = array<i64: 1, 128>}, {transform_indices = @transform_4, window_bounds = array<i64: 16, 128>}]} {
    %c0_i32 = arith.constant 0 : i32
    %0 = arith.cmpi eq, %arg1, %c0_i32 : i32
    %1 = arith.extui %0 : i1 to i32
    %c0_i32_0 = arith.constant 0 : i32
    %2 = arith.cmpi ne, %1, %c0_i32_0 : i32
    scf.if %2 {
      %cst_10 = arith.constant 0.000000e+00 : f32
      %12 = vector.broadcast %cst_10 : f32 to vector<16x640xf32>
      %c0_11 = arith.constant 0 : index
      %c0_12 = arith.constant 0 : index
      %13 = vector.load %arg7[%c0_11, %c0_12] : memref<16x640xf32, #tpu.memory_space<vmem>>, vector<16x640xf32>
      tpu.vector_store %arg7[%c0_11, %c0_12], %12 {strides = array<i32>} : memref<16x640xf32, #tpu.memory_space<vmem>>, vector<16x640xf32>,
    } else {
    }
    %c0 = arith.constant 0 : index
    %c0_1 = arith.constant 0 : index
    %3 = vector.load %arg7[%c0, %c0_1] : memref<16x640xf32, #tpu.memory_space<vmem>>, vector<16x640xf32>
    %c0_2 = arith.constant 0 : index
    %c0_3 = arith.constant 0 : index
    %4 = vector.load %arg2[%c0_2, %c0_3] : memref<16x1024xbf16, #tpu.memory_space<vmem>>, vector<16x1024xbf16>
    %c0_4 = arith.constant 0 : index
    %c0_5 = arith.constant 0 : index
    %5 = vector.load %arg3[%c0_4, %c0_5] : memref<1024x640xbf16, #tpu.memory_space<vmem>>, vector<1024x640xbf16>
    %cst = arith.constant dense<0.000000e+00> : vector<16x640xf32>
    %6 = tpu.matmul %4, %5, %cst {dimension_numbers = #tpu.dot_dimension_numbers<[1], [0], [0], [1], [0, 0, 1, 1], [], []>} : vector<16x1024xbf16>, vector<1024x640xbf16>, vector<16x640xf32> -> vector<16x640xf32>
    %7 = arith.addf %3, %6 : vector<16x640xf32>
    %c0_6 = arith.constant 0 : index
    %c0_7 = arith.constant 0 : index
    %8 = vector.load %arg7[%c0_6, %c0_7] : memref<16x640xf32, #tpu.memory_space<vmem>>, vector<16x640xf32>
    tpu.vector_store %arg7[%c0_6, %c0_7], %7 {strides = array<i32>} : memref<16x640xf32, #tpu.memory_space<vmem>>, vector<16x640xf32>,
    %c0_i32_8 = arith.constant 0 : i32
    %9 = arith.cmpi eq, %arg1, %c0_i32_8 : i32
    %10 = arith.extui %9 : i1 to i32
    %c0_i32_9 = arith.constant 0 : i32
    %11 = arith.cmpi ne, %10, %c0_i32_9 : i32
    scf.if %11 {
      %c0_10 = arith.constant 0 : index
      %c0_11 = arith.constant 0 : index
      %12 = vector.load %arg7[%c0_10, %c0_11] : memref<16x640xf32, #tpu.memory_space<vmem>>, vector<16x640xf32>
      %13 = arith.truncf %12 : vector<16x640xf32> to vector<16x640xbf16>
      %c0_12 = arith.constant 0 : index
      %c0_13 = arith.constant 0 : index
      %14 = vector.load %arg4[%c0_12, %c0_13] : memref<640x128xbf16, #tpu.memory_space<vmem>>, vector<640x128xbf16>
      %cst_14 = arith.constant dense<0.000000e+00> : vector<16x128xf32>
      %15 = tpu.matmul %13, %14, %cst_14 {dimension_numbers = #tpu.dot_dimension_numbers<[1], [0], [0], [1], [0, 0, 1, 1], [], []>} : vector<16x640xbf16>, vector<640x128xbf16>, vector<16x128xf32> -> vector<16x128xf32>
      %c0_15 = arith.constant 0 : index
      %c0_16 = arith.constant 0 : index
      %16 = vector.load %arg5[%c0_15, %c0_16] : memref<1x128xf32, #tpu.memory_space<vmem>>, vector<1x128xf32>
      %17 = vector.broadcast %16 : vector<1x128xf32> to vector<16x128xf32>
      %18 = arith.addf %15, %17 : vector<16x128xf32>
      %19 = arith.negf %18 : vector<16x128xf32>
      %20 = math.exp %19 : vector<16x128xf32>
      %cst_17 = arith.constant 1.000000e+00 : f32
      %21 = vector.broadcast %cst_17 : f32 to vector<16x128xf32>
      %22 = arith.addf %21, %20 : vector<16x128xf32>
      %23 = arith.divf %21, %22 : vector<16x128xf32>
      %c0_18 = arith.constant 0 : index
      %c0_19 = arith.constant 0 : index
      %24 = vector.load %arg6[%c0_18, %c0_19] : memref<16x128xf32, #tpu.memory_space<vmem>>, vector<16x128xf32>
      tpu.vector_store %arg6[%c0_18, %c0_19], %23 {strides = array<i32>} : memref<16x128xf32, #tpu.memory_space<vmem>>, vector<16x128xf32>,
    } else {
    }
    return
  }
  func.func @transform_0(%arg0: i32, %arg1: i32) -> (i32, i32) {
    %c0_i32 = arith.constant 0 : i32
    return %arg0, %arg1 : i32, i32
  }
  func.func @transform_1(%arg0: i32, %arg1: i32) -> (i32, i32) {
    %c0_i32 = arith.constant 0 : i32
    %c0_i32_0 = arith.constant 0 : i32
    return %arg1, %c0_i32 : i32, i32
  }
  func.func @transform_2(%arg0: i32, %arg1: i32) -> (i32, i32) {
    %c0_i32 = arith.constant 0 : i32
    %c0_i32_0 = arith.constant 0 : i32
    %c0_i32_1 = arith.constant 0 : i32
    return %c0_i32, %c0_i32_0 : i32, i32
  }
  func.func @transform_3(%arg0: i32, %arg1: i32) -> (i32, i32) {
    %c0_i32 = arith.constant 0 : i32
    %c0_i32_0 = arith.constant 0 : i32
    %c0_i32_1 = arith.constant 0 : i32
    return %c0_i32, %c0_i32_0 : i32, i32
  }
  func.func @transform_4(%arg0: i32, %arg1: i32) -> (i32, i32) {
    %c0_i32 = arith.constant 0 : i32
    %c0_i32_0 = arith.constant 0 : i32
    return %arg0, %c0_i32 : i32, i32
  }
}

</mosaic_0001>

<llo_original>
// kernel: finetune_panns_forward.1
$region0: #{finetune_panns_forward.1}
  #allocation0 [shape = 'u32[]', space=smem, size = 0x4, offset = 0x4, fixed_abs, tag = 'smem constant byte address 0x4 - core index']
  #allocation1 [shape = 'u32[144,128]{1,0:T(1,128)}', space=vmem, size = 0x12000, scoped, tag = 'internal scratch']
  #allocation2 [shape = 'f32[16,640]{1,0:T(8,128)}', space=vmem, size = 0xa000, scoped, tag = 'scratch operand']
  %s0 = inlined_call_operand.hbm [shape: bf16[16,1024], index: 0, kind: input, shape index: {}]
  %s1 = inlined_call_operand.hbm [shape: bf16[1024,640], index: 1, kind: input, shape index: {}]
  %s2 = inlined_call_operand.hbm [shape: bf16[640,128], index: 2, kind: input, shape index: {}]
  %s3 = inlined_call_operand.hbm [shape: f32[1,128], index: 3, kind: input, shape index: {}]
  %s4 = inlined_call_operand.vmem [shape: f32[16,128], index: 4, kind: output, shape index: {}]
  %s5 = sld [smem:[#allocation0]]
  $region50: #{finetune_panns_forward.1} parent=0
    _
  %s7 = ssub.s32 1, %s5
  %s8 = scalar_select 0, %s7, %s5
  $region1: #{finetune_panns_forward.1} parent=0
    #allocation3 [shape = 'u8[32768]{0}', space=vmem, size = 0x8000, scoped, tag = 'input window, operand 0, single buffered']
    #allocation4 [shape = 's32[1]{0}', space=sflag, size = 0x4, scoped, tag = 'scoped memory for finetune_panns_forward.1']
    #allocation5 [shape = 'u8[1310720]{0}', space=vmem, size = 0x140000, scoped, tag = 'input window, operand 1, single buffered']
    #allocation6 [shape = 's32[1]{0}', space=sflag, size = 0x4, scoped, tag = 'scoped memory for finetune_panns_forward.1']
    #allocation7 [shape = 'u8[163840]{0}', space=vmem, size = 0x28000, scoped, tag = 'input window, operand 2, single buffered']
    #allocation8 [shape = 'u8[512]{0}', space=vmem, size = 0x400, scoped, tag = 'input window, operand 3, single buffered']
    #allocation9 [shape = 's32[1]{0}', space=sflag, size = 0x4, scoped, tag = 'scoped memory for finetune_panns_forward.1']
    %9 = vsyncpa [#allocation4], 0
    %10 = vsyncpa [#allocation6], 0
    %11 = vsyncpa [#allocation9], 0
    // Predicated region
    $region2: #{finetune_panns_forward.1} parent=1 // pred_check
      _
    $region3: #{finetune_panns_forward.1} parent=1 // pred_check_branch
      %13 = sbr.rel (0) target = $region5
    $region4: #{finetune_panns_forward.1} parent=1 // pred_region
      %s15 = ssub.s32 1024, 1024
      %16 = vsyncadd [#allocation4], %s15
      %s17 = sshll.u32 [#allocation3], 4
      %s18 = int_to_ptr.vmem [resolvable:$true] %s17
      %23 = dma.hbm_to_vmem [thread:$0]  %s0, 1024, %s18, [#allocation4], 512, 512, 32
    $region5: #{finetune_panns_forward.1} parent=1 // pred_fallthru
      _
    // Predicated region
    $region6: #{finetune_panns_forward.1} parent=1 // pred_check
      _
    $region7: #{finetune_panns_forward.1} parent=1 // pred_check_branch
      %25 = sbr.rel (0) target = $region9
    $region8: #{finetune_panns_forward.1} parent=1 // pred_region
      %s27 = ssub.s32 40960, 40960
      %28 = vsyncadd [#allocation6], %s27
      %s29 = sshll.u32 [#allocation5], 4
      %s30 = int_to_ptr.vmem [resolvable:$true] %s29
      %35 = dma.hbm_to_vmem [thread:$0]  %s1, 40960, %s30, [#allocation6], 320, 320, 20
    $region9: #{finetune_panns_forward.1} parent=1 // pred_fallthru
      _
    // Predicated region
    $region10: #{finetune_panns_forward.1} parent=1 // pred_check
      _
    $region11: #{finetune_panns_forward.1} parent=1 // pred_check_branch
      %37 = sbr.rel (0) target = $region13
    $region12: #{finetune_panns_forward.1} parent=1 // pred_region
      %s39 = ssub.s32 5120, 5120
      %40 = vsyncadd [#allocation6], %s39
      %s41 = sshll.u32 [#allocation7], 4
      %s42 = int_to_ptr.vmem [resolvable:$true] %s41
      %47 = dma.hbm_to_vmem [thread:$0]  %s2, 5120, %s42, [#allocation6], 64, 64, 4
    $region13: #{finetune_panns_forward.1} parent=1 // pred_fallthru
      _
    // Predicated region
    $region14: #{finetune_panns_forward.1} parent=1 // pred_check
      _
    $region15: #{finetune_panns_forward.1} parent=1 // pred_check_branch
      %49 = sbr.rel (0) target = $region17
    $region16: #{finetune_panns_forward.1} parent=1 // pred_region
      %s51 = ssub.s32 16, 16
      %52 = vsyncadd [#allocation9], %s51
      %s54 = sshll.u32 [#allocation8], 4
      %s55 = int_to_ptr.vmem [resolvable:$true] %s54
      %57 = dma.hbm_to_vmem [thread:$0]  %s3, 16, %s55, [#allocation9]
    $region17: #{finetune_panns_forward.1} parent=1 // pred_fallthru
      _
    // Predicated region
    $region18: #{finetune_panns_forward.1} parent=1 // pred_check
      _
    $region19: #{finetune_panns_forward.1} parent=1 // pred_check_branch
      %59 = sbr.rel (0) target = $region21
    $region20: #{finetune_panns_forward.1} parent=1 // pred_region
      %60 = dma.done [#allocation4], 1024
    $region21: #{finetune_panns_forward.1} parent=1 // pred_fallthru
      _
    // Predicated region
    $region22: #{finetune_panns_forward.1} parent=1 // pred_check
      _
    $region23: #{finetune_panns_forward.1} parent=1 // pred_check_branch
      %62 = sbr.rel (0) target = $region25
    $region24: #{finetune_panns_forward.1} parent=1 // pred_region
      %63 = dma.done [#allocation6], 40960
    $region25: #{finetune_panns_forward.1} parent=1 // pred_fallthru
      _
    // Predicated region
    $region26: #{finetune_panns_forward.1} parent=1 // pred_check
      _
    $region27: #{finetune_panns_forward.1} parent=1 // pred_check_branch
      %65 = sbr.rel (0) target = $region29
    $region28: #{finetune_panns_forward.1} parent=1 // pred_region
      %66 = dma.done [#allocation6], 5120
    $region29: #{finetune_panns_forward.1} parent=1 // pred_fallthru
      _
    // Predicated region
    $region30: #{finetune_panns_forward.1} parent=1 // pred_check
      _
    $region31: #{finetune_panns_forward.1} parent=1 // pred_check_branch
      %68 = sbr.rel (0) target = $region33
    $region32: #{finetune_panns_forward.1} parent=1 // pred_region
      %69 = dma.done [#allocation9], 16
    $region33: #{finetune_panns_forward.1} parent=1 // pred_fallthru
      _
    %p71 = scmp.eq.s32.totalorder 0, 0
    // Predicated region
    $region34: #{finetune_panns_forward.1} parent=1 // pred_check
      %p72 = pneg %p71
    $region35: #{finetune_panns_forward.1} parent=1 // pred_check_branch
      %74 = sbr.rel (%p72) target = $region37
    $region36: #{finetune_panns_forward.1} parent=1 // pred_region
      %75 = vst [vmem:[#allocation2] sm:$0xff] 0.0
      %76 = vst [vmem:[#allocation2 + $0x8] sm:$0xff] 0.0
      %77 = vst [vmem:[#allocation2 + $0x10] sm:$0xff] 0.0
      %78 = vst [vmem:[#allocation2 + $0x18] sm:$0xff] 0.0
      %79 = vst [vmem:[#allocation2 + $0x20] sm:$0xff] 0.0
      %80 = vst [vmem:[#allocation2 + $0x28] sm:$0xff] 0.0
      %81 = vst [vmem:[#allocation2 + $0x30] sm:$0xff] 0.0
      %82 = vst [vmem:[#allocation2 + $0x38] sm:$0xff] 0.0
      %83 = vst [vmem:[#allocation2 + $0x40] sm:$0xff] 0.0
      %84 = vst [vmem:[#allocation2 + $0x48] sm:$0xff] 0.0
    $region37: #{finetune_panns_forward.1} parent=1 // pred_fallthru
      _
    %v85 = vld [vmem:[#allocation2] sm:$0xff]
    %v86 = vld [vmem:[#allocation2 + $0x8] sm:$0xff]
    %v87 = vld [vmem:[#allocation2 + $0x10] sm:$0xff]
    %v88 = vld [vmem:[#allocation2 + $0x18] sm:$0xff]
    %v89 = vld [vmem:[#allocation2 + $0x20] sm:$0xff]
    %v90 = vld [vmem:[#allocation2 + $0x28] sm:$0xff]
    %v91 = vld [vmem:[#allocation2 + $0x30] sm:$0xff]
    %v92 = vld [vmem:[#allocation2 + $0x38] sm:$0xff]
    %v93 = vld [vmem:[#allocation2 + $0x40] sm:$0xff]
    %v94 = vld [vmem:[#allocation2 + $0x48] sm:$0xff]
    %v95 = vld [vmem:[#allocation3] sm:$0xff]
    %v96 = vld [vmem:[#allocation3 + $0x8] sm:$0xff]
    %v97 = vld [vmem:[#allocation3 + $0x10] sm:$0xff]
    %v98 = vld [vmem:[#allocation3 + $0x18] sm:$0xff]
    %v99 = vld [vmem:[#allocation3 + $0x20] sm:$0xff]
    %v100 = vld [vmem:[#allocation3 + $0x28] sm:$0xff]
    %v101 = vld [vmem:[#allocation3 + $0x30] sm:$0xff]
    %v102 = vld [vmem:[#allocation3 + $0x38] sm:$0xff]
    %v103 = vld [vmem:[#allocation5] sm:$0xff]
    %v104 = vld [vmem:[#allocation5 + $0x8] sm:$0xff]
    %v105 = vld [vmem:[#allocation5 + $0x10] sm:$0xf]
    %v106 = vld [vmem:[#allocation5 + $0x14] sm:$0xff]
    %v107 = vld [vmem:[#allocation5 + $0x1c] sm:$0xff]
    %v108 = vld [vmem:[#allocation5 + $0x24] sm:$0xf]
    %v109 = vld [vmem:[#allocation5 + $0x28] sm:$0xff]
    %v110 = vld [vmem:[#allocation5 + $0x30] sm:$0xff]
    %v111 = vld [vmem:[#allocation5 + $0x38] sm:$0xf]
    %v112 = vld [vmem:[#allocation5 + $0x3c] sm:$0xff]
    %v113 = vld [vmem:[#allocation5 + $0x44] sm:$0xff]
    %v114 = vld [vmem:[#allocation5 + $0x4c] sm:$0xf]
    %v115 = vld [vmem:[#allocation5 + $0x50] sm:$0xff]
    %v116 = vld [vmem:[#allocation5 + $0x58] sm:$0xff]
    %v117 = vld [vmem:[#allocation5 + $0x60] sm:$0xf]
    %v118 = vld [vmem:[#allocation5 + $0x64] sm:$0xff]
    %v119 = vld [vmem:[#allocation5 + $0x6c] sm:$0xff]
    %v120 = vld [vmem:[#allocation5 + $0x74] sm:$0xf]
    %v121 = vld [vmem:[#allocation5 + $0x78] sm:$0xff]
    %v122 = vld [vmem:[#allocation5 + $0x80] sm:$0xff]
    %v123 = vld [vmem:[#allocation5 + $0x88] sm:$0xf]
    %v124 = vld [vmem:[#allocation5 + $0x8c] sm:$0xff]
    %v125 = vld [vmem:[#allocation5 + $0x94] sm:$0xff]
    %v126 = vld [vmem:[#allocation5 + $0x9c] sm:$0xf]
    %v127 = vld [vmem:[#allocation5 + $0xa0] sm:$0xff]
    %v128 = vld [vmem:[#allocation5 + $0xa8] sm:$0xff]
    %v129 = vld [vmem:[#allocation5 + $0xb0] sm:$0xf]
    %v130 = vld [vmem:[#allocation5 + $0xb4] sm:$0xff]
    %v131 = vld [vmem:[#allocation5 + $0xbc] sm:$0xff]
    %v132 = vld [vmem:[#allocation5 + $0xc4] sm:$0xf]
    %v133 = vld [vmem:[#allocation5 + $0xc8] sm:$0xff]
    %v134 = vld [vmem:[#allocation5 + $0xd0] sm:$0xff]
    %v135 = vld [vmem:[#allocation5 + $0xd8] sm:$0xf]
    %v136 = vld [vmem:[#allocation5 + $0xdc] sm:$0xff]
    %v137 = vld [vmem:[#allocation5 + $0xe4] sm:$0xff]
    %v138 = vld [vmem:[#allocation5 + $0xec] sm:$0xf]
    %v139 = vld [vmem:[#allocation5 + $0xf0] sm:$0xff]
    %v140 = vld [vmem:[#allocation5 + $0xf8] sm:$0xff]
    %v141 = vld [vmem:[#allocation5 + $0x100] sm:$0xf]
    %v142 = vld [vmem:[#allocation5 + $0x104] sm:$0xff]
    %v143 = vld [vmem:[#allocation5 + $0x10c] sm:$0xff]
    %v144 = vld [vmem:[#allocation5 + $0x114] sm:$0xf]
    %v145 = vld [vmem:[#allocation5 + $0x118] sm:$0xff]
    %v146 = vld [vmem:[#allocation5 + $0x120] sm:$0xff]
    %v147 = vld [vmem:[#allocation5 + $0x128] sm:$0xf]
    %v148 = vld [vmem:[#allocation5 + $0x12c] sm:$0xff]
    %v149 = vld [vmem:[#allocation5 + $0x134] sm:$0xff]
    %v150 = vld [vmem:[#allocation5 + $0x13c] sm:$0xf]
    %v151 = vld [vmem:[#allocation5 + $0x140] sm:$0xff]
    %v152 = vld [vmem:[#allocation5 + $0x148] sm:$0xff]
    %v153 = vld [vmem:[#allocation5 + $0x150] sm:$0xf]
    %v154 = vld [vmem:[#allocation5 + $0x154] sm:$0xff]
    %v155 = vld [vmem:[#allocation5 + $0x15c] sm:$0xff]
    %v156 = vld [vmem:[#allocation5 + $0x164] sm:$0xf]
    %v157 = vld [vmem:[#allocation5 + $0x168] sm:$0xff]
    %v158 = vld [vmem:[#allocation5 + $0x170] sm:$0xff]
    %v159 = vld [vmem:[#allocation5 + $0x178] sm:$0xf]
    %v160 = vld [vmem:[#allocation5 + $0x17c] sm:$0xff]
    %v161 = vld [vmem:[#allocation5 + $0x184] sm:$0xff]
    %v162 = vld [vmem:[#allocation5 + $0x18c] sm:$0xf]
    %v163 = vld [vmem:[#allocation5 + $0x190] sm:$0xff]
    %v164 = vld [vmem:[#allocation5 + $0x198] sm:$0xff]
    %v165 = vld [vmem:[#allocation5 + $0x1a0] sm:$0xf]
    %v166 = vld [vmem:[#allocation5 + $0x1a4] sm:$0xff]
    %v167 = vld [vmem:[#allocation5 + $0x1ac] sm:$0xff]
    %v168 = vld [vmem:[#allocation5 + $0x1b4] sm:$0xf]
    %v169 = vld [vmem:[#allocation5 + $0x1b8] sm:$0xff]
    %v170 = vld [vmem:[#allocation5 + $0x1c0] sm:$0xff]
    %v171 = vld [vmem:[#allocation5 + $0x1c8] sm:$0xf]
    %v172 = vld [vmem:[#allocation5 + $0x1cc] sm:$0xff]
    %v173 = vld [vmem:[#allocation5 + $0x1d4] sm:$0xff]
    %v174 = vld [vmem:[#allocation5 + $0x1dc] sm:$0xf]
    %v175 = vld [vmem:[#allocation5 + $0x1e0] sm:$0xff]
    %v176 = vld [vmem:[#allocation5 + $0x1e8] sm:$0xff]
    %v177 = vld [vmem:[#allocation5 + $0x1f0] sm:$0xf]
    %v178 = vld [vmem:[#allocation5 + $0x1f4] sm:$0xff]
    %v179 = vld [vmem:[#allocation5 + $0x1fc] sm:$0xff]
    %v180 = vld [vmem:[#allocation5 + $0x204] sm:$0xf]
    %v181 = vld [vmem:[#allocation5 + $0x208] sm:$0xff]
    %v182 = vld [vmem:[#allocation5 + $0x210] sm:$0xff]
    %v183 = vld [vmem:[#allocation5 + $0x218] sm:$0xf]
    %v184 = vld [vmem:[#allocation5 + $0x21c] sm:$0xff]
    %v185 = vld [vmem:[#allocation5 + $0x224] sm:$0xff]
    %v186 = vld [vmem:[#allocation5 + $0x22c] sm:$0xf]
    %v187 = vld [vmem:[#allocation5 + $0x230] sm:$0xff]
    %v188 = vld [vmem:[#allocation5 + $0x238] sm:$0xff]
    %v189 = vld [vmem:[#allocation5 + $0x240] sm:$0xf]
    %v190 = vld [vmem:[#allocation5 + $0x244] sm:$0xff]
    %v191 = vld [vmem:[#allocation5 + $0x24c] sm:$0xff]
    %v192 = vld [vmem:[#allocation5 + $0x254] sm:$0xf]
    %v193 = vld [vmem:[#allocation5 + $0x258] sm:$0xff]
    %v194 = vld [vmem:[#allocation5 + $0x260] sm:$0xff]
    %v195 = vld [vmem:[#allocation5 + $0x268] sm:$0xf]
    %v196 = vld [vmem:[#allocation5 + $0x26c] sm:$0xff]
    %v197 = vld [vmem:[#allocation5 + $0x274] sm:$0xff]
    %v198 = vld [vmem:[#allocation5 + $0x27c] sm:$0xf]
    %v199 = vld [vmem:[#allocation5 + $0x280] sm:$0xff]
    %v200 = vld [vmem:[#allocation5 + $0x288] sm:$0xff]
    %v201 = vld [vmem:[#allocation5 + $0x290] sm:$0xf]
    %v202 = vld [vmem:[#allocation5 + $0x294] sm:$0xff]
    %v203 = vld [vmem:[#allocation5 + $0x29c] sm:$0xff]
    %v204 = vld [vmem:[#allocation5 + $0x2a4] sm:$0xf]
    %v205 = vld [vmem:[#allocation5 + $0x2a8] sm:$0xff]
    %v206 = vld [vmem:[#allocation5 + $0x2b0] sm:$0xff]
    %v207 = vld [vmem:[#allocation5 + $0x2b8] sm:$0xf]
    %v208 = vld [vmem:[#allocation5 + $0x2bc] sm:$0xff]
    %v209 = vld [vmem:[#allocation5 + $0x2c4] sm:$0xff]
    %v210 = vld [vmem:[#allocation5 + $0x2cc] sm:$0xf]
    %v211 = vld [vmem:[#allocation5 + $0x2d0] sm:$0xff]
    %v212 = vld [vmem:[#allocation5 + $0x2d8] sm:$0xff]
    %v213 = vld [vmem:[#allocation5 + $0x2e0] sm:$0xf]
    %v214 = vld [vmem:[#allocation5 + $0x2e4] sm:$0xff]
    %v215 = vld [vmem:[#allocation5 + $0x2ec] sm:$0xff]
    %v216 = vld [vmem:[#allocation5 + $0x2f4] sm:$0xf]
    %v217 = vld [vmem:[#allocation5 + $0x2f8] sm:$0xff]
    %v218 = vld [vmem:[#allocation5 + $0x300] sm:$0xff]
    %v219 = vld [vmem:[#allocation5 + $0x308] sm:$0xf]
    %v220 = vld [vmem:[#allocation5 + $0x30c] sm:$0xff]
    %v221 = vld [vmem:[#allocation5 + $0x314] sm:$0xff]
    %v222 = vld [vmem:[#allocation5 + $0x31c] sm:$0xf]
    %v223 = vld [vmem:[#allocation5 + $0x320] sm:$0xff]
    %v224 = vld [vmem:[#allocation5 + $0x328] sm:$0xff]
    %v225 = vld [vmem:[#allocation5 + $0x330] sm:$0xf]
    %v226 = vld [vmem:[#allocation5 + $0x334] sm:$0xff]
    %v227 = vld [vmem:[#allocation5 + $0x33c] sm:$0xff]
    %v228 = vld [vmem:[#allocation5 + $0x344] sm:$0xf]
    %v229 = vld [vmem:[#allocation5 + $0x348] sm:$0xff]
    %v230 = vld [vmem:[#allocation5 + $0x350] sm:$0xff]
    %v231 = vld [vmem:[#allocation5 + $0x358] sm:$0xf]
    %v232 = vld [vmem:[#allocation5 + $0x35c] sm:$0xff]
    %v233 = vld [vmem:[#allocation5 + $0x364] sm:$0xff]
    %v234 = vld [vmem:[#allocation5 + $0x36c] sm:$0xf]
    %v235 = vld [vmem:[#allocation5 + $0x370] sm:$0xff]
    %v236 = vld [vmem:[#allocation5 + $0x378] sm:$0xff]
    %v237 = vld [vmem:[#allocation5 + $0x380] sm:$0xf]
    %v238 = vld [vmem:[#allocation5 + $0x384] sm:$0xff]
    %v239 = vld [vmem:[#allocation5 + $0x38c] sm:$0xff]
    %v240 = vld [vmem:[#allocation5 + $0x394] sm:$0xf]
    %v241 = vld [vmem:[#allocation5 + $0x398] sm:$0xff]
    %v242 = vld [vmem:[#allocation5 + $0x3a0] sm:$0xff]
    %v243 = vld [vmem:[#allocation5 + $0x3a8] sm:$0xf]
    %v244 = vld [vmem:[#allocation5 + $0x3ac] sm:$0xff]
    %v245 = vld [vmem:[#allocation5 + $0x3b4] sm:$0xff]
    %v246 = vld [vmem:[#allocation5 + $0x3bc] sm:$0xf]
    %v247 = vld [vmem:[#allocation5 + $0x3c0] sm:$0xff]
    %v248 = vld [vmem:[#allocation5 + $0x3c8] sm:$0xff]
    %v249 = vld [vmem:[#allocation5 + $0x3d0] sm:$0xf]
    %v250 = vld [vmem:[#allocation5 + $0x3d4] sm:$0xff]
    %v251 = vld [vmem:[#allocation5 + $0x3dc] sm:$0xff]
    %v252 = vld [vmem:[#allocation5 + $0x3e4] sm:$0xf]
    %v253 = vld [vmem:[#allocation5 + $0x3e8] sm:$0xff]
    %v254 = vld [vmem:[#allocation5 + $0x3f0] sm:$0xff]
    %v255 = vld [vmem:[#allocation5 + $0x3f8] sm:$0xf]
    %v256 = vld [vmem:[#allocation5 + $0x3fc] sm:$0xff]
    %v257 = vld [vmem:[#allocation5 + $0x404] sm:$0xff]
    %v258 = vld [vmem:[#allocation5 + $0x40c] sm:$0xf]
    %v259 = vld [vmem:[#allocation5 + $0x410] sm:$0xff]
    %v260 = vld [vmem:[#allocation5 + $0x418] sm:$0xff]
    %v261 = vld [vmem:[#allocation5 + $0x420] sm:$0xf]
    %v262 = vld [vmem:[#allocation5 + $0x424] sm:$0xff]
    %v263 = vld [vmem:[#allocation5 + $0x42c] sm:$0xff]
    %v264 = vld [vmem:[#allocation5 + $0x434] sm:$0xf]
    %v265 = vld [vmem:[#allocation5 + $0x438] sm:$0xff]
    %v266 = vld [vmem:[#allocation5 + $0x440] sm:$0xff]
    %v267 = vld [vmem:[#allocation5 + $0x448] sm:$0xf]
    %v268 = vld [vmem:[#allocation5 + $0x44c] sm:$0xff]
    %v269 = vld [vmem:[#allocation5 + $0x454] sm:$0xff]
    %v270 = vld [vmem:[#allocation5 + $0x45c] sm:$0xf]
    %v271 = vld [vmem:[#allocation5 + $0x460] sm:$0xff]
    %v272 = vld [vmem:[#allocation5 + $0x468] sm:$0xff]
    %v273 = vld [vmem:[#allocation5 + $0x470] sm:$0xf]
    %v274 = vld [vmem:[#allocation5 + $0x474] sm:$0xff]
    %v275 = vld [vmem:[#allocation5 + $0x47c] sm:$0xff]
    %v276 = vld [vmem:[#allocation5 + $0x484] sm:$0xf]
    %v277 = vld [vmem:[#allocation5 + $0x488] sm:$0xff]
    %v278 = vld [vmem:[#allocation5 + $0x490] sm:$0xff]
    %v279 = vld [vmem:[#allocation5 + $0x498] sm:$0xf]
    %v280 = vld [vmem:[#allocation5 + $0x49c] sm:$0xff]
    %v281 = vld [vmem:[#allocation5 + $0x4a4] sm:$0xff]
    %v282 = vld [vmem:[#allocation5 + $0x4ac] sm:$0xf]
    %v283 = vld [vmem:[#allocation5 + $0x4b0] sm:$0xff]
    %v284 = vld [vmem:[#allocation5 + $0x4b8] sm:$0xff]
    %v285 = vld [vmem:[#allocation5 + $0x4c0] sm:$0xf]
    %v286 = vld [vmem:[#allocation5 + $0x4c4] sm:$0xff]
    %v287 = vld [vmem:[#allocation5 + $0x4cc] sm:$0xff]
    %v288 = vld [vmem:[#allocation5 + $0x4d4] sm:$0xf]
    %v289 = vld [vmem:[#allocation5 + $0x4d8] sm:$0xff]
    %v290 = vld [vmem:[#allocation5 + $0x4e0] sm:$0xff]
    %v291 = vld [vmem:[#allocation5 + $0x4e8] sm:$0xf]
    %v292 = vld [vmem:[#allocation5 + $0x4ec] sm:$0xff]
    %v293 = vld [vmem:[#allocation5 + $0x4f4] sm:$0xff]
    %v294 = vld [vmem:[#allocation5 + $0x4fc] sm:$0xf]
    %v295 = vld [vmem:[#allocation5 + $0x500] sm:$0xff]
    %v296 = vld [vmem:[#allocation5 + $0x508] sm:$0xff]
    %v297 = vld [vmem:[#allocation5 + $0x510] sm:$0xf]
    %v298 = vld [vmem:[#allocation5 + $0x514] sm:$0xff]
    %v299 = vld [vmem:[#allocation5 + $0x51c] sm:$0xff]
    %v300 = vld [vmem:[#allocation5 + $0x524] sm:$0xf]
    %v301 = vld [vmem:[#allocation5 + $0x528] sm:$0xff]
    %v302 = vld [vmem:[#allocation5 + $0x530] sm:$0xff]
    %v303 = vld [vmem:[#allocation5 + $0x538] sm:$0xf]
    %v304 = vld [vmem:[#allocation5 + $0x53c] sm:$0xff]
    %v305 = vld [vmem:[#allocation5 + $0x544] sm:$0xff]
    %v306 = vld [vmem:[#allocation5 + $0x54c] sm:$0xf]
    %v307 = vld [vmem:[#allocation5 + $0x550] sm:$0xff]
    %v308 = vld [vmem:[#allocation5 + $0x558] sm:$0xff]
    %v309 = vld [vmem:[#allocation5 + $0x560] sm:$0xf]
    %v310 = vld [vmem:[#allocation5 + $0x564] sm:$0xff]
    %v311 = vld [vmem:[#allocation5 + $0x56c] sm:$0xff]
    %v312 = vld [vmem:[#allocation5 + $0x574] sm:$0xf]
    %v313 = vld [vmem:[#allocation5 + $0x578] sm:$0xff]
    %v314 = vld [vmem:[#allocation5 + $0x580] sm:$0xff]
    %v315 = vld [vmem:[#allocation5 + $0x588] sm:$0xf]
    %v316 = vld [vmem:[#allocation5 + $0x58c] sm:$0xff]
    %v317 = vld [vmem:[#allocation5 + $0x594] sm:$0xff]
    %v318 = vld [vmem:[#allocation5 + $0x59c] sm:$0xf]
    %v319 = vld [vmem:[#allocation5 + $0x5a0] sm:$0xff]
    %v320 = vld [vmem:[#allocation5 + $0x5a8] sm:$0xff]
    %v321 = vld [vmem:[#allocation5 + $0x5b0] sm:$0xf]
    %v322 = vld [vmem:[#allocation5 + $0x5b4] sm:$0xff]
    %v323 = vld [vmem:[#allocation5 + $0x5bc] sm:$0xff]
    %v324 = vld [vmem:[#allocation5 + $0x5c4] sm:$0xf]
    %v325 = vld [vmem:[#allocation5 + $0x5c8] sm:$0xff]
    %v326 = vld [vmem:[#allocation5 + $0x5d0] sm:$0xff]
    %v327 = vld [vmem:[#allocation5 + $0x5d8] sm:$0xf]
    %v328 = vld [vmem:[#allocation5 + $0x5dc] sm:$0xff]
    %v329 = vld [vmem:[#allocation5 + $0x5e4] sm:$0xff]
    %v330 = vld [vmem:[#allocation5 + $0x5ec] sm:$0xf]
    %v331 = vld [vmem:[#allocation5 + $0x5f0] sm:$0xff]
    %v332 = vld [vmem:[#allocation5 + $0x5f8] sm:$0xff]
    %v333 = vld [vmem:[#allocation5 + $0x600] sm:$0xf]
    %v334 = vld [vmem:[#allocation5 + $0x604] sm:$0xff]
    %v335 = vld [vmem:[#allocation5 + $0x60c] sm:$0xff]
    %v336 = vld [vmem:[#allocation5 + $0x614] sm:$0xf]
    %v337 = vld [vmem:[#allocation5 + $0x618] sm:$0xff]
    %v338 = vld [vmem:[#allocation5 + $0x620] sm:$0xff]
    %v339 = vld [vmem:[#allocation5 + $0x628] sm:$0xf]
    %v340 = vld [vmem:[#allocation5 + $0x62c] sm:$0xff]
    %v341 = vld [vmem:[#allocation5 + $0x634] sm:$0xff]
    %v342 = vld [vmem:[#allocation5 + $0x63c] sm:$0xf]
    %v343 = vld [vmem:[#allocation5 + $0x640] sm:$0xff]
    %v344 = vld [vmem:[#allocation5 + $0x648] sm:$0xff]
    %v345 = vld [vmem:[#allocation5 + $0x650] sm:$0xf]
    %v346 = vld [vmem:[#allocation5 + $0x654] sm:$0xff]
    %v347 = vld [vmem:[#allocation5 + $0x65c] sm:$0xff]
    %v348 = vld [vmem:[#allocation5 + $0x664] sm:$0xf]
    %v349 = vld [vmem:[#allocation5 + $0x668] sm:$0xff]
    %v350 = vld [vmem:[#allocation5 + $0x670] sm:$0xff]
    %v351 = vld [vmem:[#allocation5 + $0x678] sm:$0xf]
    %v352 = vld [vmem:[#allocation5 + $0x67c] sm:$0xff]
    %v353 = vld [vmem:[#allocation5 + $0x684] sm:$0xff]
    %v354 = vld [vmem:[#allocation5 + $0x68c] sm:$0xf]
    %v355 = vld [vmem:[#allocation5 + $0x690] sm:$0xff]
    %v356 = vld [vmem:[#allocation5 + $0x698] sm:$0xff]
    %v357 = vld [vmem:[#allocation5 + $0x6a0] sm:$0xf]
    %v358 = vld [vmem:[#allocation5 + $0x6a4] sm:$0xff]
    %v359 = vld [vmem:[#allocation5 + $0x6ac] sm:$0xff]
    %v360 = vld [vmem:[#allocation5 + $0x6b4] sm:$0xf]
    %v361 = vld [vmem:[#allocation5 + $0x6b8] sm:$0xff]
    %v362 = vld [vmem:[#allocation5 + $0x6c0] sm:$0xff]
    %v363 = vld [vmem:[#allocation5 + $0x6c8] sm:$0xf]
    %v364 = vld [vmem:[#allocation5 + $0x6cc] sm:$0xff]
    %v365 = vld [vmem:[#allocation5 + $0x6d4] sm:$0xff]
    %v366 = vld [vmem:[#allocation5 + $0x6dc] sm:$0xf]
    %v367 = vld [vmem:[#allocation5 + $0x6e0] sm:$0xff]
    %v368 = vld [vmem:[#allocation5 + $0x6e8] sm:$0xff]
    %v369 = vld [vmem:[#allocation5 + $0x6f0] sm:$0xf]
    %v370 = vld [vmem:[#allocation5 + $0x6f4] sm:$0xff]
    %v371 = vld [vmem:[#allocation5 + $0x6fc] sm:$0xff]
    %v372 = vld [vmem:[#allocation5 + $0x704] sm:$0xf]
    %v373 = vld [vmem:[#allocation5 + $0x708] sm:$0xff]
    %v374 = vld [vmem:[#allocation5 + $0x710] sm:$0xff]
    %v375 = vld [vmem:[#allocation5 + $0x718] sm:$0xf]
    %v376 = vld [vmem:[#allocation5 + $0x71c] sm:$0xff]
    %v377 = vld [vmem:[#allocation5 + $0x724] sm:$0xff]
    %v378 = vld [vmem:[#allocation5 + $0x72c] sm:$0xf]
    %v379 = vld [vmem:[#allocation5 + $0x730] sm:$0xff]
    %v380 = vld [vmem:[#allocation5 + $0x738] sm:$0xff]
    %v381 = vld [vmem:[#allocation5 + $0x740] sm:$0xf]
    %v382 = vld [vmem:[#allocation5 + $0x744] sm:$0xff]
    %v383 = vld [vmem:[#allocation5 + $0x74c] sm:$0xff]
    %v384 = vld [vmem:[#allocation5 + $0x754] sm:$0xf]
    %v385 = vld [vmem:[#allocation5 + $0x758] sm:$0xff]
    %v386 = vld [vmem:[#allocation5 + $0x760] sm:$0xff]
    %v387 = vld [vmem:[#allocation5 + $0x768] sm:$0xf]
    %v388 = vld [vmem:[#allocation5 + $0x76c] sm:$0xff]
    %v389 = vld [vmem:[#allocation5 + $0x774] sm:$0xff]
    %v390 = vld [vmem:[#allocation5 + $0x77c] sm:$0xf]
    %v391 = vld [vmem:[#allocation5 + $0x780] sm:$0xff]
    %v392 = vld [vmem:[#allocation5 + $0x788] sm:$0xff]
    %v393 = vld [vmem:[#allocation5 + $0x790] sm:$0xf]
    %v394 = vld [vmem:[#allocation5 + $0x794] sm:$0xff]
    %v395 = vld [vmem:[#allocation5 + $0x79c] sm:$0xff]
    %v396 = vld [vmem:[#allocation5 + $0x7a4] sm:$0xf]
    %v397 = vld [vmem:[#allocation5 + $0x7a8] sm:$0xff]
    %v398 = vld [vmem:[#allocation5 + $0x7b0] sm:$0xff]
    %v399 = vld [vmem:[#allocation5 + $0x7b8] sm:$0xf]
    %v400 = vld [vmem:[#allocation5 + $0x7bc] sm:$0xff]
    %v401 = vld [vmem:[#allocation5 + $0x7c4] sm:$0xff]
    %v402 = vld [vmem:[#allocation5 + $0x7cc] sm:$0xf]
    %v403 = vld [vmem:[#allocation5 + $0x7d0] sm:$0xff]
    %v404 = vld [vmem:[#allocation5 + $0x7d8] sm:$0xff]
    %v405 = vld [vmem:[#allocation5 + $0x7e0] sm:$0xf]
    %v406 = vld [vmem:[#allocation5 + $0x7e4] sm:$0xff]
    %v407 = vld [vmem:[#allocation5 + $0x7ec] sm:$0xff]
    %v408 = vld [vmem:[#allocation5 + $0x7f4] sm:$0xf]
    %v409 = vld [vmem:[#allocation5 + $0x7f8] sm:$0xff]
    %v410 = vld [vmem:[#allocation5 + $0x800] sm:$0xff]
    %v411 = vld [vmem:[#allocation5 + $0x808] sm:$0xf]
    %v412 = vld [vmem:[#allocation5 + $0x80c] sm:$0xff]
    %v413 = vld [vmem:[#allocation5 + $0x814] sm:$0xff]
    %v414 = vld [vmem:[#allocation5 + $0x81c] sm:$0xf]
    %v415 = vld [vmem:[#allocation5 + $0x820] sm:$0xff]
    %v416 = vld [vmem:[#allocation5 + $0x828] sm:$0xff]
    %v417 = vld [vmem:[#allocation5 + $0x830] sm:$0xf]
    %v418 = vld [vmem:[#allocation5 + $0x834] sm:$0xff]
    %v419 = vld [vmem:[#allocation5 + $0x83c] sm:$0xff]
    %v420 = vld [vmem:[#allocation5 + $0x844] sm:$0xf]
    %v421 = vld [vmem:[#allocation5 + $0x848] sm:$0xff]
    %v422 = vld [vmem:[#allocation5 + $0x850] sm:$0xff]
    %v423 = vld [vmem:[#allocation5 + $0x858] sm:$0xf]
    %v424 = vld [vmem:[#allocation5 + $0x85c] sm:$0xff]
    %v425 = vld [vmem:[#allocation5 + $0x864] sm:$0xff]
    %v426 = vld [vmem:[#allocation5 + $0x86c] sm:$0xf]
    %v427 = vld [vmem:[#allocation5 + $0x870] sm:$0xff]
    %v428 = vld [vmem:[#allocation5 + $0x878] sm:$0xff]
    %v429 = vld [vmem:[#allocation5 + $0x880] sm:$0xf]
    %v430 = vld [vmem:[#allocation5 + $0x884] sm:$0xff]
    %v431 = vld [vmem:[#allocation5 + $0x88c] sm:$0xff]
    %v432 = vld [vmem:[#allocation5 + $0x894] sm:$0xf]
    %v433 = vld [vmem:[#allocation5 + $0x898] sm:$0xff]
    %v434 = vld [vmem:[#allocation5 + $0x8a0] sm:$0xff]
    %v435 = vld [vmem:[#allocation5 + $0x8a8] sm:$0xf]
    %v436 = vld [vmem:[#allocation5 + $0x8ac] sm:$0xff]
    %v437 = vld [vmem:[#allocation5 + $0x8b4] sm:$0xff]
    %v438 = vld [vmem:[#allocation5 + $0x8bc] sm:$0xf]
    %v439 = vld [vmem:[#allocation5 + $0x8c0] sm:$0xff]
    %v440 = vld [vmem:[#allocation5 + $0x8c8] sm:$0xff]
    %v441 = vld [vmem:[#allocation5 + $0x8d0] sm:$0xf]
    %v442 = vld [vmem:[#allocation5 + $0x8d4] sm:$0xff]
    %v443 = vld [vmem:[#allocation5 + $0x8dc] sm:$0xff]
    %v444 = vld [vmem:[#allocation5 + $0x8e4] sm:$0xf]
    %v445 = vld [vmem:[#allocation5 + $0x8e8] sm:$0xff]
    %v446 = vld [vmem:[#allocation5 + $0x8f0] sm:$0xff]
    %v447 = vld [vmem:[#allocation5 + $0x8f8] sm:$0xf]
    %v448 = vld [vmem:[#allocation5 + $0x8fc] sm:$0xff]
    %v449 = vld [vmem:[#allocation5 + $0x904] sm:$0xff]
    %v450 = vld [vmem:[#allocation5 + $0x90c] sm:$0xf]
    %v451 = vld [vmem:[#allocation5 + $0x910] sm:$0xff]
    %v452 = vld [vmem:[#allocation5 + $0x918] sm:$0xff]
    %v453 = vld [vmem:[#allocation5 + $0x920] sm:$0xf]
    %v454 = vld [vmem:[#allocation5 + $0x924] sm:$0xff]
    %v455 = vld [vmem:[#allocation5 + $0x92c] sm:$0xff]
    %v456 = vld [vmem:[#allocation5 + $0x934] sm:$0xf]
    %v457 = vld [vmem:[#allocation5 + $0x938] sm:$0xff]
    %v458 = vld [vmem:[#allocation5 + $0x940] sm:$0xff]
    %v459 = vld [vmem:[#allocation5 + $0x948] sm:$0xf]
    %v460 = vld [vmem:[#allocation5 + $0x94c] sm:$0xff]
    %v461 = vld [vmem:[#allocation5 + $0x954] sm:$0xff]
    %v462 = vld [vmem:[#allocation5 + $0x95c] sm:$0xf]
    %v463 = vld [vmem:[#allocation5 + $0x960] sm:$0xff]
    %v464 = vld [vmem:[#allocation5 + $0x968] sm:$0xff]
    %v465 = vld [vmem:[#allocation5 + $0x970] sm:$0xf]
    %v466 = vld [vmem:[#allocation5 + $0x974] sm:$0xff]
    %v467 = vld [vmem:[#allocation5 + $0x97c] sm:$0xff]
    %v468 = vld [vmem:[#allocation5 + $0x984] sm:$0xf]
    %v469 = vld [vmem:[#allocation5 + $0x988] sm:$0xff]
    %v470 = vld [vmem:[#allocation5 + $0x990] sm:$0xff]
    %v471 = vld [vmem:[#allocation5 + $0x998] sm:$0xf]
    %v472 = vld [vmem:[#allocation5 + $0x99c] sm:$0xff]
    %v473 = vld [vmem:[#allocation5 + $0x9a4] sm:$0xff]
    %v474 = vld [vmem:[#allocation5 + $0x9ac] sm:$0xf]
    %v475 = vld [vmem:[#allocation5 + $0x9b0] sm:$0xff]
    %v476 = vld [vmem:[#allocation5 + $0x9b8] sm:$0xff]
    %v477 = vld [vmem:[#allocation5 + $0x9c0] sm:$0xf]
    %v478 = vld [vmem:[#allocation5 + $0x9c4] sm:$0xff]
    %v479 = vld [vmem:[#allocation5 + $0x9cc] sm:$0xff]
    %v480 = vld [vmem:[#allocation5 + $0x9d4] sm:$0xf]
    %v481 = vld [vmem:[#allocation5 + $0x9d8] sm:$0xff]
    %v482 = vld [vmem:[#allocation5 + $0x9e0] sm:$0xff]
    %v483 = vld [vmem:[#allocation5 + $0x9e8] sm:$0xf]
    %v484 = vld [vmem:[#allocation5 + $0x9ec] sm:$0xff]
    %v485 = vld [vmem:[#allocation5 + $0x9f4] sm:$0xff]
    %v486 = vld [vmem:[#allocation5 + $0x9fc] sm:$0xf]
    %v495 = vunpack.c.l.b16 %v95
    %v496 = vunpack.c.h.b16 %v95
    %v497 = vunpack.c.l.b16 %v96
    %v498 = vunpack.c.h.b16 %v96
    %v499 = vunpack.c.l.b16 %v97
    %v500 = vunpack.c.h.b16 %v97
    %v501 = vunpack.c.l.b16 %v98
    %v502 = vunpack.c.h.b16 %v98
    %v503 = vunpack.c.l.b16 %v99
    %v504 = vunpack.c.h.b16 %v99
    %v505 = vunpack.c.l.b16 %v100
    %v506 = vunpack.c.h.b16 %v100
    %v507 = vunpack.c.l.b16 %v101
    %v508 = vunpack.c.h.b16 %v101
    %v509 = vunpack.c.l.b16 %v102
    %v510 = vunpack.c.h.b16 %v102
    %v511 = vpack.c.b16 %v503, %v495
    %v512 = vpack.c.b16 %v504, %v496
    %v513 = vpack.c.b16 %v505, %v497
    %v514 = vpack.c.b16 %v506, %v498
    %v515 = vpack.c.b16 %v507, %v499
    %v516 = vpack.c.b16 %v508, %v500
    %v517 = vpack.c.b16 %v509, %v501
    %v518 = vpack.c.b16 %v510, %v502
    %v911 = vunpack.c.l.b16 %v103
    %v912 = vunpack.c.h.b16 %v103
    %v913 = vunpack.c.l.b16 %v104
    %v914 = vunpack.c.h.b16 %v104
    %v915 = vunpack.c.l.b16 %v105
    %v916 = vunpack.c.l.b16 %v106
    %v917 = vunpack.c.h.b16 %v106
    %v918 = vunpack.c.l.b16 %v107
    %v919 = vunpack.c.h.b16 %v107
    %v920 = vunpack.c.l.b16 %v108
    %v921 = vunpack.c.l.b16 %v109
    %v922 = vunpack.c.h.b16 %v109
    %v923 = vunpack.c.l.b16 %v110
    %v924 = vunpack.c.h.b16 %v110
    %v925 = vunpack.c.l.b16 %v111
    %v926 = vunpack.c.l.b16 %v112
    %v927 = vunpack.c.h.b16 %v112
    %v928 = vunpack.c.l.b16 %v113
    %v929 = vunpack.c.h.b16 %v113
    %v930 = vunpack.c.l.b16 %v114
    %v931 = vunpack.c.l.b16 %v115
    %v932 = vunpack.c.h.b16 %v115
    %v933 = vunpack.c.l.b16 %v116
    %v934 = vunpack.c.h.b16 %v116
    %v935 = vunpack.c.l.b16 %v117
    %v936 = vunpack.c.l.b16 %v118
    %v937 = vunpack.c.h.b16 %v118
    %v938 = vunpack.c.l.b16 %v119
    %v939 = vunpack.c.h.b16 %v119
    %v940 = vunpack.c.l.b16 %v120
    %v941 = vunpack.c.l.b16 %v121
    %v942 = vunpack.c.h.b16 %v121
    %v943 = vunpack.c.l.b16 %v122
    %v944 = vunpack.c.h.b16 %v122
    %v945 = vunpack.c.l.b16 %v123
    %v946 = vunpack.c.l.b16 %v124
    %v947 = vunpack.c.h.b16 %v124
    %v948 = vunpack.c.l.b16 %v125
    %v949 = vunpack.c.h.b16 %v125
    %v950 = vunpack.c.l.b16 %v126
    %v951 = vunpack.c.l.b16 %v127
    %v952 = vunpack.c.h.b16 %v127
    %v953 = vunpack.c.l.b16 %v128
    %v954 = vunpack.c.h.b16 %v128
    %v955 = vunpack.c.l.b16 %v129
    %v956 = vunpack.c.l.b16 %v130
    %v957 = vunpack.c.h.b16 %v130
    %v958 = vunpack.c.l.b16 %v131
    %v959 = vunpack.c.h.b16 %v131
    %v960 = vunpack.c.l.b16 %v132
    %v961 = vunpack.c.l.b16 %v133
    %v962 = vunpack.c.h.b16 %v133
    %v963 = vunpack.c.l.b16 %v134
    %v964 = vunpack.c.h.b16 %v134
    %v965 = vunpack.c.l.b16 %v135
    %v966 = vunpack.c.l.b16 %v136
    %v967 = vunpack.c.h.b16 %v136
    %v968 = vunpack.c.l.b16 %v137
    %v969 = vunpack.c.h.b16 %v137
    %v970 = vunpack.c.l.b16 %v138
    %v971 = vunpack.c.l.b16 %v139
    %v972 = vunpack.c.h.b16 %v139
    %v973 = vunpack.c.l.b16 %v140
    %v974 = vunpack.c.h.b16 %v140
    %v975 = vunpack.c.l.b16 %v141
    %v976 = vunpack.c.l.b16 %v142
    %v977 = vunpack.c.h.b16 %v142
    %v978 = vunpack.c.l.b16 %v143
    %v979 = vunpack.c.h.b16 %v143
    %v980 = vunpack.c.l.b16 %v144
    %v981 = vunpack.c.l.b16 %v145
    %v982 = vunpack.c.h.b16 %v145
    %v983 = vunpack.c.l.b16 %v146
    %v984 = vunpack.c.h.b16 %v146
    %v985 = vunpack.c.l.b16 %v147
    %v986 = vunpack.c.l.b16 %v148
    %v987 = vunpack.c.h.b16 %v148
    %v988 = vunpack.c.l.b16 %v149
    %v989 = vunpack.c.h.b16 %v149
    %v990 = vunpack.c.l.b16 %v150
    %v991 = vunpack.c.l.b16 %v151
    %v992 = vunpack.c.h.b16 %v151
    %v993 = vunpack.c.l.b16 %v152
    %v994 = vunpack.c.h.b16 %v152
    %v995 = vunpack.c.l.b16 %v153
    %v996 = vunpack.c.l.b16 %v154
    %v997 = vunpack.c.h.b16 %v154
    %v998 = vunpack.c.l.b16 %v155
    %v999 = vunpack.c.h.b16 %v155
    %v1000 = vunpack.c.l.b16 %v156
    %v1001 = vunpack.c.l.b16 %v157
    %v1002 = vunpack.c.h.b16 %v157
    %v1003 = vunpack.c.l.b16 %v158
    %v1004 = vunpack.c.h.b16 %v158
    %v1005 = vunpack.c.l.b16 %v159
    %v1006 = vunpack.c.l.b16 %v160
    %v1007 = vunpack.c.h.b16 %v160
    %v1008 = vunpack.c.l.b16 %v161
    %v1009 = vunpack.c.h.b16 %v161
    %v1010 = vunpack.c.l.b16 %v162
    %v1011 = vunpack.c.l.b16 %v163
    %v1012 = vunpack.c.h.b16 %v163
    %v1013 = vunpack.c.l.b16 %v164
    %v1014 = vunpack.c.h.b16 %v164
    %v1015 = vunpack.c.l.b16 %v165
    %v1016 = vunpack.c.l.b16 %v166
    %v1017 = vunpack.c.h.b16 %v166
    %v1018 = vunpack.c.l.b16 %v167
    %v1019 = vunpack.c.h.b16 %v167
    %v1020 = vunpack.c.l.b16 %v168
    %v1021 = vunpack.c.l.b16 %v169
    %v1022 = vunpack.c.h.b16 %v169
    %v1023 = vunpack.c.l.b16 %v170
    %v1024 = vunpack.c.h.b16 %v170
    %v1025 = vunpack.c.l.b16 %v171
    %v1026 = vunpack.c.l.b16 %v172
    %v1027 = vunpack.c.h.b16 %v172
    %v1028 = vunpack.c.l.b16 %v173
    %v1029 = vunpack.c.h.b16 %v173
    %v1030 = vunpack.c.l.b16 %v174
    %v1031 = vunpack.c.l.b16 %v175
    %v1032 = vunpack.c.h.b16 %v175
    %v1033 = vunpack.c.l.b16 %v176
    %v1034 = vunpack.c.h.b16 %v176
    %v1035 = vunpack.c.l.b16 %v177
    %v1036 = vunpack.c.l.b16 %v178
    %v1037 = vunpack.c.h.b16 %v178
    %v1038 = vunpack.c.l.b16 %v179
    %v1039 = vunpack.c.h.b16 %v179
    %v1040 = vunpack.c.l.b16 %v180
    %v1041 = vunpack.c.l.b16 %v181
    %v1042 = vunpack.c.h.b16 %v181
    %v1043 = vunpack.c.l.b16 %v182
    %v1044 = vunpack.c.h.b16 %v182
    %v1045 = vunpack.c.l.b16 %v183
    %v1046 = vunpack.c.l.b16 %v184
    %v1047 = vunpack.c.h.b16 %v184
    %v1048 = vunpack.c.l.b16 %v185
    %v1049 = vunpack.c.h.b16 %v185
    %v1050 = vunpack.c.l.b16 %v186
    %v1051 = vunpack.c.l.b16 %v187
    %v1052 = vunpack.c.h.b16 %v187
    %v1053 = vunpack.c.l.b16 %v188
    %v1054 = vunpack.c.h.b16 %v188
    %v1055 = vunpack.c.l.b16 %v189
    %v1056 = vunpack.c.l.b16 %v190
    %v1057 = vunpack.c.h.b16 %v190
    %v1058 = vunpack.c.l.b16 %v191
    %v1059 = vunpack.c.h.b16 %v191
    %v1060 = vunpack.c.l.b16 %v192
    %v1061 = vunpack.c.l.b16 %v193
    %v1062 = vunpack.c.h.b16 %v193
    %v1063 = vunpack.c.l.b16 %v194
    %v1064 = vunpack.c.h.b16 %v194
    %v1065 = vunpack.c.l.b16 %v195
    %v1066 = vunpack.c.l.b16 %v196
    %v1067 = vunpack.c.h.b16 %v196
    %v1068 = vunpack.c.l.b16 %v197
    %v1069 = vunpack.c.h.b16 %v197
    %v1070 = vunpack.c.l.b16 %v198
    %v1071 = vunpack.c.l.b16 %v199
    %v1072 = vunpack.c.h.b16 %v199
    %v1073 = vunpack.c.l.b16 %v200
    %v1074 = vunpack.c.h.b16 %v200
    %v1075 = vunpack.c.l.b16 %v201
    %v1076 = vunpack.c.l.b16 %v202
    %v1077 = vunpack.c.h.b16 %v202
    %v1078 = vunpack.c.l.b16 %v203
    %v1079 = vunpack.c.h.b16 %v203
    %v1080 = vunpack.c.l.b16 %v204
    %v1081 = vunpack.c.l.b16 %v205
    %v1082 = vunpack.c.h.b16 %v205
    %v1083 = vunpack.c.l.b16 %v206
    %v1084 = vunpack.c.h.b16 %v206
    %v1085 = vunpack.c.l.b16 %v207
    %v1086 = vunpack.c.l.b16 %v208
    %v1087 = vunpack.c.h.b16 %v208
    %v1088 = vunpack.c.l.b16 %v209
    %v1089 = vunpack.c.h.b16 %v209
    %v1090 = vunpack.c.l.b16 %v210
    %v1091 = vunpack.c.l.b16 %v211
    %v1092 = vunpack.c.h.b16 %v211
    %v1093 = vunpack.c.l.b16 %v212
    %v1094 = vunpack.c.h.b16 %v212
    %v1095 = vunpack.c.l.b16 %v213
    %v1096 = vunpack.c.l.b16 %v214
    %v1097 = vunpack.c.h.b16 %v214
    %v1098 = vunpack.c.l.b16 %v215
    %v1099 = vunpack.c.h.b16 %v215
    %v1100 = vunpack.c.l.b16 %v216
    %v1101 = vunpack.c.l.b16 %v217
    %v1102 = vunpack.c.h.b16 %v217
    %v1103 = vunpack.c.l.b16 %v218
    %v1104 = vunpack.c.h.b16 %v218
    %v1105 = vunpack.c.l.b16 %v219
    %v1106 = vunpack.c.l.b16 %v220
    %v1107 = vunpack.c.h.b16 %v220
    %v1108 = vunpack.c.l.b16 %v221
    %v1109 = vunpack.c.h.b16 %v221
    %v1110 = vunpack.c.l.b16 %v222
    %v1111 = vunpack.c.l.b16 %v223
    %v1112 = vunpack.c.h.b16 %v223
    %v1113 = vunpack.c.l.b16 %v224
    %v1114 = vunpack.c.h.b16 %v224
    %v1115 = vunpack.c.l.b16 %v225
    %v1116 = vunpack.c.l.b16 %v226
    %v1117 = vunpack.c.h.b16 %v226
    %v1118 = vunpack.c.l.b16 %v227
    %v1119 = vunpack.c.h.b16 %v227
    %v1120 = vunpack.c.l.b16 %v228
    %v1121 = vunpack.c.l.b16 %v229
    %v1122 = vunpack.c.h.b16 %v229
    %v1123 = vunpack.c.l.b16 %v230
    %v1124 = vunpack.c.h.b16 %v230
    %v1125 = vunpack.c.l.b16 %v231
    %v1126 = vunpack.c.l.b16 %v232
    %v1127 = vunpack.c.h.b16 %v232
    %v1128 = vunpack.c.l.b16 %v233
    %v1129 = vunpack.c.h.b16 %v233
    %v1130 = vunpack.c.l.b16 %v234
    %v1131 = vunpack.c.l.b16 %v235
    %v1132 = vunpack.c.h.b16 %v235
    %v1133 = vunpack.c.l.b16 %v236
    %v1134 = vunpack.c.h.b16 %v236
    %v1135 = vunpack.c.l.b16 %v237
    %v1136 = vunpack.c.l.b16 %v238
    %v1137 = vunpack.c.h.b16 %v238
    %v1138 = vunpack.c.l.b16 %v239
    %v1139 = vunpack.c.h.b16 %v239
    %v1140 = vunpack.c.l.b16 %v240
    %v1141 = vunpack.c.l.b16 %v241
    %v1142 = vunpack.c.h.b16 %v241
    %v1143 = vunpack.c.l.b16 %v242
    %v1144 = vunpack.c.h.b16 %v242
    %v1145 = vunpack.c.l.b16 %v243
    %v1146 = vunpack.c.l.b16 %v244
    %v1147 = vunpack.c.h.b16 %v244
    %v1148 = vunpack.c.l.b16 %v245
    %v1149 = vunpack.c.h.b16 %v245
    %v1150 = vunpack.c.l.b16 %v246
    %v1151 = vunpack.c.l.b16 %v247
    %v1152 = vunpack.c.h.b16 %v247
    %v1153 = vunpack.c.l.b16 %v248
    %v1154 = vunpack.c.h.b16 %v248
    %v1155 = vunpack.c.l.b16 %v249
    %v1156 = vunpack.c.l.b16 %v250
    %v1157 = vunpack.c.h.b16 %v250
    %v1158 = vunpack.c.l.b16 %v251
    %v1159 = vunpack.c.h.b16 %v251
    %v1160 = vunpack.c.l.b16 %v252
    %v1161 = vunpack.c.l.b16 %v253
    %v1162 = vunpack.c.h.b16 %v253
    %v1163 = vunpack.c.l.b16 %v254
    %v1164 = vunpack.c.h.b16 %v254
    %v1165 = vunpack.c.l.b16 %v255
    %v1166 = vunpack.c.l.b16 %v256
    %v1167 = vunpack.c.h.b16 %v256
    %v1168 = vunpack.c.l.b16 %v257
    %v1169 = vunpack.c.h.b16 %v257
    %v1170 = vunpack.c.l.b16 %v258
    %v1171 = vunpack.c.l.b16 %v259
    %v1172 = vunpack.c.h.b16 %v259
    %v1173 = vunpack.c.l.b16 %v260
    %v1174 = vunpack.c.h.b16 %v260
    %v1175 = vunpack.c.l.b16 %v261
    %v1176 = vunpack.c.l.b16 %v262
    %v1177 = vunpack.c.h.b16 %v262
    %v1178 = vunpack.c.l.b16 %v263
    %v1179 = vunpack.c.h.b16 %v263
    %v1180 = vunpack.c.l.b16 %v264
    %v1181 = vunpack.c.l.b16 %v265
    %v1182 = vunpack.c.h.b16 %v265
    %v1183 = vunpack.c.l.b16 %v266
    %v1184 = vunpack.c.h.b16 %v266
    %v1185 = vunpack.c.l.b16 %v267
    %v1186 = vunpack.c.l.b16 %v268
    %v1187 = vunpack.c.h.b16 %v268
    %v1188 = vunpack.c.l.b16 %v269
    %v1189 = vunpack.c.h.b16 %v269
    %v1190 = vunpack.c.l.b16 %v270
    %v1191 = vunpack.c.l.b16 %v271
    %v1192 = vunpack.c.h.b16 %v271
    %v1193 = vunpack.c.l.b16 %v272
    %v1194 = vunpack.c.h.b16 %v272
    %v1195 = vunpack.c.l.b16 %v273
    %v1196 = vunpack.c.l.b16 %v274
    %v1197 = vunpack.c.h.b16 %v274
    %v1198 = vunpack.c.l.b16 %v275
    %v1199 = vunpack.c.h.b16 %v275
    %v1200 = vunpack.c.l.b16 %v276
    %v1201 = vunpack.c.l.b16 %v277
    %v1202 = vunpack.c.h.b16 %v277
    %v1203 = vunpack.c.l.b16 %v278
    %v1204 = vunpack.c.h.b16 %v278
    %v1205 = vunpack.c.l.b16 %v279
    %v1206 = vunpack.c.l.b16 %v280
    %v1207 = vunpack.c.h.b16 %v280
    %v1208 = vunpack.c.l.b16 %v281
    %v1209 = vunpack.c.h.b16 %v281
    %v1210 = vunpack.c.l.b16 %v282
    %v1211 = vunpack.c.l.b16 %v283
    %v1212 = vunpack.c.h.b16 %v283
    %v1213 = vunpack.c.l.b16 %v284
    %v1214 = vunpack.c.h.b16 %v284
    %v1215 = vunpack.c.l.b16 %v285
    %v1216 = vunpack.c.l.b16 %v286
    %v1217 = vunpack.c.h.b16 %v286
    %v1218 = vunpack.c.l.b16 %v287
    %v1219 = vunpack.c.h.b16 %v287
    %v1220 = vunpack.c.l.b16 %v288
    %v1221 = vunpack.c.l.b16 %v289
    %v1222 = vunpack.c.h.b16 %v289
    %v1223 = vunpack.c.l.b16 %v290
    %v1224 = vunpack.c.h.b16 %v290
    %v1225 = vunpack.c.l.b16 %v291
    %v1226 = vunpack.c.l.b16 %v292
    %v1227 = vunpack.c.h.b16 %v292
    %v1228 = vunpack.c.l.b16 %v293
    %v1229 = vunpack.c.h.b16 %v293
    %v1230 = vunpack.c.l.b16 %v294
    %v1231 = vunpack.c.l.b16 %v295
    %v1232 = vunpack.c.h.b16 %v295
    %v1233 = vunpack.c.l.b16 %v296
    %v1234 = vunpack.c.h.b16 %v296
    %v1235 = vunpack.c.l.b16 %v297
    %v1236 = vunpack.c.l.b16 %v298
    %v1237 = vunpack.c.h.b16 %v298
    %v1238 = vunpack.c.l.b16 %v299
    %v1239 = vunpack.c.h.b16 %v299
    %v1240 = vunpack.c.l.b16 %v300
    %v1241 = vunpack.c.l.b16 %v301
    %v1242 = vunpack.c.h.b16 %v301
    %v1243 = vunpack.c.l.b16 %v302
    %v1244 = vunpack.c.h.b16 %v302
    %v1245 = vunpack.c.l.b16 %v303
    %v1246 = vunpack.c.l.b16 %v304
    %v1247 = vunpack.c.h.b16 %v304
    %v1248 = vunpack.c.l.b16 %v305
    %v1249 = vunpack.c.h.b16 %v305
    %v1250 = vunpack.c.l.b16 %v306
    %v1251 = vunpack.c.l.b16 %v307
    %v1252 = vunpack.c.h.b16 %v307
    %v1253 = vunpack.c.l.b16 %v308
    %v1254 = vunpack.c.h.b16 %v308
    %v1255 = vunpack.c.l.b16 %v309
    %v1256 = vunpack.c.l.b16 %v310
    %v1257 = vunpack.c.h.b16 %v310
    %v1258 = vunpack.c.l.b16 %v311
    %v1259 = vunpack.c.h.b16 %v311
    %v1260 = vunpack.c.l.b16 %v312
    %v1261 = vunpack.c.l.b16 %v313
    %v1262 = vunpack.c.h.b16 %v313
    %v1263 = vunpack.c.l.b16 %v314
    %v1264 = vunpack.c.h.b16 %v314
    %v1265 = vunpack.c.l.b16 %v315
    %v1266 = vunpack.c.l.b16 %v316
    %v1267 = vunpack.c.h.b16 %v316
    %v1268 = vunpack.c.l.b16 %v317
    %v1269 = vunpack.c.h.b16 %v317
    %v1270 = vunpack.c.l.b16 %v318
    %v1271 = vunpack.c.l.b16 %v319
    %v1272 = vunpack.c.h.b16 %v319
    %v1273 = vunpack.c.l.b16 %v320
    %v1274 = vunpack.c.h.b16 %v320
    %v1275 = vunpack.c.l.b16 %v321
    %v1276 = vunpack.c.l.b16 %v322
    %v1277 = vunpack.c.h.b16 %v322
    %v1278 = vunpack.c.l.b16 %v323
    %v1279 = vunpack.c.h.b16 %v323
    %v1280 = vunpack.c.l.b16 %v324
    %v1281 = vunpack.c.l.b16 %v325
    %v1282 = vunpack.c.h.b16 %v325
    %v1283 = vunpack.c.l.b16 %v326
    %v1284 = vunpack.c.h.b16 %v326
    %v1285 = vunpack.c.l.b16 %v327
    %v1286 = vunpack.c.l.b16 %v328
    %v1287 = vunpack.c.h.b16 %v328
    %v1288 = vunpack.c.l.b16 %v329
    %v1289 = vunpack.c.h.b16 %v329
    %v1290 = vunpack.c.l.b16 %v330
    %v1291 = vunpack.c.l.b16 %v331
    %v1292 = vunpack.c.h.b16 %v331
    %v1293 = vunpack.c.l.b16 %v332
    %v1294 = vunpack.c.h.b16 %v332
    %v1295 = vunpack.c.l.b16 %v333
    %v1296 = vunpack.c.l.b16 %v334
    %v1297 = vunpack.c.h.b16 %v334
    %v1298 = vunpack.c.l.b16 %v335
    %v1299 = vunpack.c.h.b16 %v335
    %v1300 = vunpack.c.l.b16 %v336
    %v1301 = vunpack.c.l.b16 %v337
    %v1302 = vunpack.c.h.b16 %v337
    %v1303 = vunpack.c.l.b16 %v338
    %v1304 = vunpack.c.h.b16 %v338
    %v1305 = vunpack.c.l.b16 %v339
    %v1306 = vunpack.c.l.b16 %v340
    %v1307 = vunpack.c.h.b16 %v340
    %v1308 = vunpack.c.l.b16 %v341
    %v1309 = vunpack.c.h.b16 %v341
    %v1310 = vunpack.c.l.b16 %v342
    %v1311 = vunpack.c.l.b16 %v343
    %v1312 = vunpack.c.h.b16 %v343
    %v1313 = vunpack.c.l.b16 %v344
    %v1314 = vunpack.c.h.b16 %v344
    %v1315 = vunpack.c.l.b16 %v345
    %v1316 = vunpack.c.l.b16 %v346
    %v1317 = vunpack.c.h.b16 %v346
    %v1318 = vunpack.c.l.b16 %v347
    %v1319 = vunpack.c.h.b16 %v347
    %v1320 = vunpack.c.l.b16 %v348
    %v1321 = vunpack.c.l.b16 %v349
    %v1322 = vunpack.c.h.b16 %v349
    %v1323 = vunpack.c.l.b16 %v350
    %v1324 = vunpack.c.h.b16 %v350
    %v1325 = vunpack.c.l.b16 %v351
    %v1326 = vunpack.c.l.b16 %v352
    %v1327 = vunpack.c.h.b16 %v352
    %v1328 = vunpack.c.l.b16 %v353
    %v1329 = vunpack.c.h.b16 %v353
    %v1330 = vunpack.c.l.b16 %v354
    %v1331 = vunpack.c.l.b16 %v355
    %v1332 = vunpack.c.h.b16 %v355
    %v1333 = vunpack.c.l.b16 %v356
    %v1334 = vunpack.c.h.b16 %v356
    %v1335 = vunpack.c.l.b16 %v357
    %v1336 = vunpack.c.l.b16 %v358
    %v1337 = vunpack.c.h.b16 %v358
    %v1338 = vunpack.c.l.b16 %v359
    %v1339 = vunpack.c.h.b16 %v359
    %v1340 = vunpack.c.l.b16 %v360
    %v1341 = vunpack.c.l.b16 %v361
    %v1342 = vunpack.c.h.b16 %v361
    %v1343 = vunpack.c.l.b16 %v362
    %v1344 = vunpack.c.h.b16 %v362
    %v1345 = vunpack.c.l.b16 %v363
    %v1346 = vunpack.c.l.b16 %v364
    %v1347 = vunpack.c.h.b16 %v364
    %v1348 = vunpack.c.l.b16 %v365
    %v1349 = vunpack.c.h.b16 %v365
    %v1350 = vunpack.c.l.b16 %v366
    %v1351 = vunpack.c.l.b16 %v367
    %v1352 = vunpack.c.h.b16 %v367
    %v1353 = vunpack.c.l.b16 %v368
    %v1354 = vunpack.c.h.b16 %v368
    %v1355 = vunpack.c.l.b16 %v369
    %v1356 = vunpack.c.l.b16 %v370
    %v1357 = vunpack.c.h.b16 %v370
    %v1358 = vunpack.c.l.b16 %v371
    %v1359 = vunpack.c.h.b16 %v371
    %v1360 = vunpack.c.l.b16 %v372
    %v1361 = vunpack.c.l.b16 %v373
    %v1362 = vunpack.c.h.b16 %v373
    %v1363 = vunpack.c.l.b16 %v374
    %v1364 = vunpack.c.h.b16 %v374
    %v1365 = vunpack.c.l.b16 %v375
    %v1366 = vunpack.c.l.b16 %v376
    %v1367 = vunpack.c.h.b16 %v376
    %v1368 = vunpack.c.l.b16 %v377
    %v1369 = vunpack.c.h.b16 %v377
    %v1370 = vunpack.c.l.b16 %v378
    %v1371 = vunpack.c.l.b16 %v379
    %v1372 = vunpack.c.h.b16 %v379
    %v1373 = vunpack.c.l.b16 %v380
    %v1374 = vunpack.c.h.b16 %v380
    %v1375 = vunpack.c.l.b16 %v381
    %v1376 = vunpack.c.l.b16 %v382
    %v1377 = vunpack.c.h.b16 %v382
    %v1378 = vunpack.c.l.b16 %v383
    %v1379 = vunpack.c.h.b16 %v383
    %v1380 = vunpack.c.l.b16 %v384
    %v1381 = vunpack.c.l.b16 %v385
    %v1382 = vunpack.c.h.b16 %v385
    %v1383 = vunpack.c.l.b16 %v386
    %v1384 = vunpack.c.h.b16 %v386
    %v1385 = vunpack.c.l.b16 %v387
    %v1386 = vunpack.c.l.b16 %v388
    %v1387 = vunpack.c.h.b16 %v388
    %v1388 = vunpack.c.l.b16 %v389
    %v1389 = vunpack.c.h.b16 %v389
    %v1390 = vunpack.c.l.b16 %v390
    %v1391 = vunpack.c.l.b16 %v391
    %v1392 = vunpack.c.h.b16 %v391
    %v1393 = vunpack.c.l.b16 %v392
    %v1394 = vunpack.c.h.b16 %v392
    %v1395 = vunpack.c.l.b16 %v393
    %v1396 = vunpack.c.l.b16 %v394
    %v1397 = vunpack.c.h.b16 %v394
    %v1398 = vunpack.c.l.b16 %v395
    %v1399 = vunpack.c.h.b16 %v395
    %v1400 = vunpack.c.l.b16 %v396
    %v1401 = vunpack.c.l.b16 %v397
    %v1402 = vunpack.c.h.b16 %v397
    %v1403 = vunpack.c.l.b16 %v398
    %v1404 = vunpack.c.h.b16 %v398
    %v1405 = vunpack.c.l.b16 %v399
    %v1406 = vunpack.c.l.b16 %v400
    %v1407 = vunpack.c.h.b16 %v400
    %v1408 = vunpack.c.l.b16 %v401
    %v1409 = vunpack.c.h.b16 %v401
    %v1410 = vunpack.c.l.b16 %v402
    %v1411 = vunpack.c.l.b16 %v403
    %v1412 = vunpack.c.h.b16 %v403
    %v1413 = vunpack.c.l.b16 %v404
    %v1414 = vunpack.c.h.b16 %v404
    %v1415 = vunpack.c.l.b16 %v405
    %v1416 = vunpack.c.l.b16 %v406
    %v1417 = vunpack.c.h.b16 %v406
    %v1418 = vunpack.c.l.b16 %v407
    %v1419 = vunpack.c.h.b16 %v407
    %v1420 = vunpack.c.l.b16 %v408
    %v1421 = vunpack.c.l.b16 %v409
    %v1422 = vunpack.c.h.b16 %v409
    %v1423 = vunpack.c.l.b16 %v410
    %v1424 = vunpack.c.h.b16 %v410
    %v1425 = vunpack.c.l.b16 %v411
    %v1426 = vunpack.c.l.b16 %v412
    %v1427 = vunpack.c.h.b16 %v412
    %v1428 = vunpack.c.l.b16 %v413
    %v1429 = vunpack.c.h.b16 %v413
    %v1430 = vunpack.c.l.b16 %v414
    %v1431 = vunpack.c.l.b16 %v415
    %v1432 = vunpack.c.h.b16 %v415
    %v1433 = vunpack.c.l.b16 %v416
    %v1434 = vunpack.c.h.b16 %v416
    %v1435 = vunpack.c.l.b16 %v417
    %v1436 = vunpack.c.l.b16 %v418
    %v1437 = vunpack.c.h.b16 %v418
    %v1438 = vunpack.c.l.b16 %v419
    %v1439 = vunpack.c.h.b16 %v419
    %v1440 = vunpack.c.l.b16 %v420
    %v1441 = vunpack.c.l.b16 %v421
    %v1442 = vunpack.c.h.b16 %v421
    %v1443 = vunpack.c.l.b16 %v422
    %v1444 = vunpack.c.h.b16 %v422
    %v1445 = vunpack.c.l.b16 %v423
    %v1446 = vunpack.c.l.b16 %v424
    %v1447 = vunpack.c.h.b16 %v424
    %v1448 = vunpack.c.l.b16 %v425
    %v1449 = vunpack.c.h.b16 %v425
    %v1450 = vunpack.c.l.b16 %v426
    %v1451 = vunpack.c.l.b16 %v427
    %v1452 = vunpack.c.h.b16 %v427
    %v1453 = vunpack.c.l.b16 %v428
    %v1454 = vunpack.c.h.b16 %v428
    %v1455 = vunpack.c.l.b16 %v429
    %v1456 = vunpack.c.l.b16 %v430
    %v1457 = vunpack.c.h.b16 %v430
    %v1458 = vunpack.c.l.b16 %v431
    %v1459 = vunpack.c.h.b16 %v431
    %v1460 = vunpack.c.l.b16 %v432
    %v1461 = vunpack.c.l.b16 %v433
    %v1462 = vunpack.c.h.b16 %v433
    %v1463 = vunpack.c.l.b16 %v434
    %v1464 = vunpack.c.h.b16 %v434
    %v1465 = vunpack.c.l.b16 %v435
    %v1466 = vunpack.c.l.b16 %v436
    %v1467 = vunpack.c.h.b16 %v436
    %v1468 = vunpack.c.l.b16 %v437
    %v1469 = vunpack.c.h.b16 %v437
    %v1470 = vunpack.c.l.b16 %v438
    %v1471 = vunpack.c.l.b16 %v439
    %v1472 = vunpack.c.h.b16 %v439
    %v1473 = vunpack.c.l.b16 %v440
    %v1474 = vunpack.c.h.b16 %v440
    %v1475 = vunpack.c.l.b16 %v441
    %v1476 = vunpack.c.l.b16 %v442
    %v1477 = vunpack.c.h.b16 %v442
    %v1478 = vunpack.c.l.b16 %v443
    %v1479 = vunpack.c.h.b16 %v443
    %v1480 = vunpack.c.l.b16 %v444
    %v1481 = vunpack.c.l.b16 %v445
    %v1482 = vunpack.c.h.b16 %v445
    %v1483 = vunpack.c.l.b16 %v446
    %v1484 = vunpack.c.h.b16 %v446
    %v1485 = vunpack.c.l.b16 %v447
    %v1486 = vunpack.c.l.b16 %v448
    %v1487 = vunpack.c.h.b16 %v448
    %v1488 = vunpack.c.l.b16 %v449
    %v1489 = vunpack.c.h.b16 %v449
    %v1490 = vunpack.c.l.b16 %v450
    %v1491 = vunpack.c.l.b16 %v451
    %v1492 = vunpack.c.h.b16 %v451
    %v1493 = vunpack.c.l.b16 %v452
    %v1494 = vunpack.c.h.b16 %v452
    %v1495 = vunpack.c.l.b16 %v453
    %v1496 = vunpack.c.l.b16 %v454
    %v1497 = vunpack.c.h.b16 %v454
    %v1498 = vunpack.c.l.b16 %v455
    %v1499 = vunpack.c.h.b16 %v455
    %v1500 = vunpack.c.l.b16 %v456
    %v1501 = vunpack.c.l.b16 %v457
    %v1502 = vunpack.c.h.b16 %v457
    %v1503 = vunpack.c.l.b16 %v458
    %v1504 = vunpack.c.h.b16 %v458
    %v1505 = vunpack.c.l.b16 %v459
    %v1506 = vunpack.c.l.b16 %v460
    %v1507 = vunpack.c.h.b16 %v460
    %v1508 = vunpack.c.l.b16 %v461
    %v1509 = vunpack.c.h.b16 %v461
    %v1510 = vunpack.c.l.b16 %v462
    %v1511 = vunpack.c.l.b16 %v463
    %v1512 = vunpack.c.h.b16 %v463
    %v1513 = vunpack.c.l.b16 %v464
    %v1514 = vunpack.c.h.b16 %v464
    %v1515 = vunpack.c.l.b16 %v465
    %v1516 = vunpack.c.l.b16 %v466
    %v1517 = vunpack.c.h.b16 %v466
    %v1518 = vunpack.c.l.b16 %v467
    %v1519 = vunpack.c.h.b16 %v467
    %v1520 = vunpack.c.l.b16 %v468
    %v1521 = vunpack.c.l.b16 %v469
    %v1522 = vunpack.c.h.b16 %v469
    %v1523 = vunpack.c.l.b16 %v470
    %v1524 = vunpack.c.h.b16 %v470
    %v1525 = vunpack.c.l.b16 %v471
    %v1526 = vunpack.c.l.b16 %v472
    %v1527 = vunpack.c.h.b16 %v472
    %v1528 = vunpack.c.l.b16 %v473
    %v1529 = vunpack.c.h.b16 %v473
    %v1530 = vunpack.c.l.b16 %v474
    %v1531 = vunpack.c.l.b16 %v475
    %v1532 = vunpack.c.h.b16 %v475
    %v1533 = vunpack.c.l.b16 %v476
    %v1534 = vunpack.c.h.b16 %v476
    %v1535 = vunpack.c.l.b16 %v477
    %v1536 = vunpack.c.l.b16 %v478
    %v1537 = vunpack.c.h.b16 %v478
    %v1538 = vunpack.c.l.b16 %v479
    %v1539 = vunpack.c.h.b16 %v479
    %v1540 = vunpack.c.l.b16 %v480
    %v1541 = vunpack.c.l.b16 %v481
    %v1542 = vunpack.c.h.b16 %v481
    %v1543 = vunpack.c.l.b16 %v482
    %v1544 = vunpack.c.h.b16 %v482
    %v1545 = vunpack.c.l.b16 %v483
    %v1546 = vunpack.c.l.b16 %v484
    %v1547 = vunpack.c.h.b16 %v484
    %v1548 = vunpack.c.l.b16 %v485
    %v1549 = vunpack.c.h.b16 %v485
    %v1550 = vunpack.c.l.b16 %v486
    %v1551 = vpack.c.b16 %v916, %v911
    %v1552 = vpack.c.b16 %v917, %v912
    %v1553 = vpack.c.b16 %v918, %v913
    %v1554 = vpack.c.b16 %v919, %v914
    %v1555 = vpack.c.b16 %v920, %v915
    %v1556 = vpack.c.b16 %v926, %v921
    %v1557 = vpack.c.b16 %v927, %v922
    %v1558 = vpack.c.b16 %v928, %v923
    %v1559 = vpack.c.b16 %v929, %v924
    %v1560 = vpack.c.b16 %v930, %v925
    %v1561 = vpack.c.b16 %v936, %v931
    %v1562 = vpack.c.b16 %v937, %v932
    %v1563 = vpack.c.b16 %v938, %v933
    %v1564 = vpack.c.b16 %v939, %v934
    %v1565 = vpack.c.b16 %v940, %v935
    %v1566 = vpack.c.b16 %v946, %v941
    %v1567 = vpack.c.b16 %v947, %v942
    %v1568 = vpack.c.b16 %v948, %v943
    %v1569 = vpack.c.b16 %v949, %v944
    %v1570 = vpack.c.b16 %v950, %v945
    %v1571 = vpack.c.b16 %v956, %v951
    %v1572 = vpack.c.b16 %v957, %v952
    %v1573 = vpack.c.b16 %v958, %v953
    %v1574 = vpack.c.b16 %v959, %v954
    %v1575 = vpack.c.b16 %v960, %v955
    %v1576 = vpack.c.b16 %v966, %v961
    %v1577 = vpack.c.b16 %v967, %v962
    %v1578 = vpack.c.b16 %v968, %v963
    %v1579 = vpack.c.b16 %v969, %v964
    %v1580 = vpack.c.b16 %v970, %v965
    %v1581 = vpack.c.b16 %v976, %v971
    %v1582 = vpack.c.b16 %v977, %v972
    %v1583 = vpack.c.b16 %v978, %v973
    %v1584 = vpack.c.b16 %v979, %v974
    %v1585 = vpack.c.b16 %v980, %v975
    %v1586 = vpack.c.b16 %v986, %v981
    %v1587 = vpack.c.b16 %v987, %v982
    %v1588 = vpack.c.b16 %v988, %v983
    %v1589 = vpack.c.b16 %v989, %v984
    %v1590 = vpack.c.b16 %v990, %v985
    %v1591 = vpack.c.b16 %v996, %v991
    %v1592 = vpack.c.b16 %v997, %v992
    %v1593 = vpack.c.b16 %v998, %v993
    %v1594 = vpack.c.b16 %v999, %v994
    %v1595 = vpack.c.b16 %v1000, %v995
    %v1596 = vpack.c.b16 %v1006, %v1001
    %v1597 = vpack.c.b16 %v1007, %v1002
    %v1598 = vpack.c.b16 %v1008, %v1003
    %v1599 = vpack.c.b16 %v1009, %v1004
    %v1600 = vpack.c.b16 %v1010, %v1005
    %v1601 = vpack.c.b16 %v1016, %v1011
    %v1602 = vpack.c.b16 %v1017, %v1012
    %v1603 = vpack.c.b16 %v1018, %v1013
    %v1604 = vpack.c.b16 %v1019, %v1014
    %v1605 = vpack.c.b16 %v1020, %v1015
    %v1606 = vpack.c.b16 %v1026, %v1021
    %v1607 = vpack.c.b16 %v1027, %v1022
    %v1608 = vpack.c.b16 %v1028, %v1023
    %v1609 = vpack.c.b16 %v1029, %v1024
    %v1610 = vpack.c.b16 %v1030, %v1025
    %v1611 = vpack.c.b16 %v1036, %v1031
    %v1612 = vpack.c.b16 %v1037, %v1032
    %v1613 = vpack.c.b16 %v1038, %v1033
    %v1614 = vpack.c.b16 %v1039, %v1034
    %v1615 = vpack.c.b16 %v1040, %v1035
    %v1616 = vpack.c.b16 %v1046, %v1041
    %v1617 = vpack.c.b16 %v1047, %v1042
    %v1618 = vpack.c.b16 %v1048, %v1043
    %v1619 = vpack.c.b16 %v1049, %v1044
    %v1620 = vpack.c.b16 %v1050, %v1045
    %v1621 = vpack.c.b16 %v1056, %v1051
    %v1622 = vpack.c.b16 %v1057, %v1052
    %v1623 = vpack.c.b16 %v1058, %v1053
    %v1624 = vpack.c.b16 %v1059, %v1054
    %v1625 = vpack.c.b16 %v1060, %v1055
    %v1626 = vpack.c.b16 %v1066, %v1061
    %v1627 = vpack.c.b16 %v1067, %v1062
    %v1628 = vpack.c.b16 %v1068, %v1063
    %v1629 = vpack.c.b16 %v1069, %v1064
    %v1630 = vpack.c.b16 %v1070, %v1065
    %v1631 = vpack.c.b16 %v1076, %v1071
    %v1632 = vpack.c.b16 %v1077, %v1072
    %v1633 = vpack.c.b16 %v1078, %v1073
    %v1634 = vpack.c.b16 %v1079, %v1074
    %v1635 = vpack.c.b16 %v1080, %v1075
    %v1636 = vpack.c.b16 %v1086, %v1081
    %v1637 = vpack.c.b16 %v1087, %v1082
    %v1638 = vpack.c.b16 %v1088, %v1083
    %v1639 = vpack.c.b16 %v1089, %v1084
    %v1640 = vpack.c.b16 %v1090, %v1085
    %v1641 = vpack.c.b16 %v1096, %v1091
    %v1642 = vpack.c.b16 %v1097, %v1092
    %v1643 = vpack.c.b16 %v1098, %v1093
    %v1644 = vpack.c.b16 %v1099, %v1094
    %v1645 = vpack.c.b16 %v1100, %v1095
    %v1646 = vpack.c.b16 %v1106, %v1101
    %v1647 = vpack.c.b16 %v1107, %v1102
    %v1648 = vpack.c.b16 %v1108, %v1103
    %v1649 = vpack.c.b16 %v1109, %v1104
    %v1650 = vpack.c.b16 %v1110, %v1105
    %v1651 = vpack.c.b16 %v1116, %v1111
    %v1652 = vpack.c.b16 %v1117, %v1112
    %v1653 = vpack.c.b16 %v1118, %v1113
    %v1654 = vpack.c.b16 %v1119, %v1114
    %v1655 = vpack.c.b16 %v1120, %v1115
    %v1656 = vpack.c.b16 %v1126, %v1121
    %v1657 = vpack.c.b16 %v1127, %v1122
    %v1658 = vpack.c.b16 %v1128, %v1123
    %v1659 = vpack.c.b16 %v1129, %v1124
    %v1660 = vpack.c.b16 %v1130, %v1125
    %v1661 = vpack.c.b16 %v1136, %v1131
    %v1662 = vpack.c.b16 %v1137, %v1132
    %v1663 = vpack.c.b16 %v1138, %v1133
    %v1664 = vpack.c.b16 %v1139, %v1134
    %v1665 = vpack.c.b16 %v1140, %v1135
    %v1666 = vpack.c.b16 %v1146, %v1141
    %v1667 = vpack.c.b16 %v1147, %v1142
    %v1668 = vpack.c.b16 %v1148, %v1143
    %v1669 = vpack.c.b16 %v1149, %v1144
    %v1670 = vpack.c.b16 %v1150, %v1145
    %v1671 = vpack.c.b16 %v1156, %v1151
    %v1672 = vpack.c.b16 %v1157, %v1152
    %v1673 = vpack.c.b16 %v1158, %v1153
    %v1674 = vpack.c.b16 %v1159, %v1154
    %v1675 = vpack.c.b16 %v1160, %v1155
    %v1676 = vpack.c.b16 %v1166, %v1161
    %v1677 = vpack.c.b16 %v1167, %v1162
    %v1678 = vpack.c.b16 %v1168, %v1163
    %v1679 = vpack.c.b16 %v1169, %v1164
    %v1680 = vpack.c.b16 %v1170, %v1165
    %v1681 = vpack.c.b16 %v1176, %v1171
    %v1682 = vpack.c.b16 %v1177, %v1172
    %v1683 = vpack.c.b16 %v1178, %v1173
    %v1684 = vpack.c.b16 %v1179, %v1174
    %v1685 = vpack.c.b16 %v1180, %v1175
    %v1686 = vpack.c.b16 %v1186, %v1181
    %v1687 = vpack.c.b16 %v1187, %v1182
    %v1688 = vpack.c.b16 %v1188, %v1183
    %v1689 = vpack.c.b16 %v1189, %v1184
    %v1690 = vpack.c.b16 %v1190, %v1185
    %v1691 = vpack.c.b16 %v1196, %v1191
    %v1692 = vpack.c.b16 %v1197, %v1192
    %v1693 = vpack.c.b16 %v1198, %v1193
    %v1694 = vpack.c.b16 %v1199, %v1194
    %v1695 = vpack.c.b16 %v1200, %v1195
    %v1696 = vpack.c.b16 %v1206, %v1201
    %v1697 = vpack.c.b16 %v1207, %v1202
    %v1698 = vpack.c.b16 %v1208, %v1203
    %v1699 = vpack.c.b16 %v1209, %v1204
    %v1700 = vpack.c.b16 %v1210, %v1205
    %v1701 = vpack.c.b16 %v1216, %v1211
    %v1702 = vpack.c.b16 %v1217, %v1212
    %v1703 = vpack.c.b16 %v1218, %v1213
    %v1704 = vpack.c.b16 %v1219, %v1214
    %v1705 = vpack.c.b16 %v1220, %v1215
    %v1706 = vpack.c.b16 %v1226, %v1221
    %v1707 = vpack.c.b16 %v1227, %v1222
    %v1708 = vpack.c.b16 %v1228, %v1223
    %v1709 = vpack.c.b16 %v1229, %v1224
    %v1710 = vpack.c.b16 %v1230, %v1225
    %v1711 = vpack.c.b16 %v1236, %v1231
    %v1712 = vpack.c.b16 %v1237, %v1232
    %v1713 = vpack.c.b16 %v1238, %v1233
    %v1714 = vpack.c.b16 %v1239, %v1234
    %v1715 = vpack.c.b16 %v1240, %v1235
    %v1716 = vpack.c.b16 %v1246, %v1241
    %v1717 = vpack.c.b16 %v1247, %v1242
    %v1718 = vpack.c.b16 %v1248, %v1243
    %v1719 = vpack.c.b16 %v1249, %v1244
    %v1720 = vpack.c.b16 %v1250, %v1245
    %v1721 = vpack.c.b16 %v1256, %v1251
    %v1722 = vpack.c.b16 %v1257, %v1252
    %v1723 = vpack.c.b16 %v1258, %v1253
    %v1724 = vpack.c.b16 %v1259, %v1254
    %v1725 = vpack.c.b16 %v1260, %v1255
    %v1726 = vpack.c.b16 %v1266, %v1261
    %v1727 = vpack.c.b16 %v1267, %v1262
    %v1728 = vpack.c.b16 %v1268, %v1263
    %v1729 = vpack.c.b16 %v1269, %v1264
    %v1730 = vpack.c.b16 %v1270, %v1265
    %v1731 = vpack.c.b16 %v1276, %v1271
    %v1732 = vpack.c.b16 %v1277, %v1272
    %v1733 = vpack.c.b16 %v1278, %v1273
    %v1734 = vpack.c.b16 %v1279, %v1274
    %v1735 = vpack.c.b16 %v1280, %v1275
    %v1736 = vpack.c.b16 %v1286, %v1281
    %v1737 = vpack.c.b16 %v1287, %v1282
    %v1738 = vpack.c.b16 %v1288, %v1283
    %v1739 = vpack.c.b16 %v1289, %v1284
    %v1740 = vpack.c.b16 %v1290, %v1285
    %v1741 = vpack.c.b16 %v1296, %v1291
    %v1742 = vpack.c.b16 %v1297, %v1292
    %v1743 = vpack.c.b16 %v1298, %v1293
    %v1744 = vpack.c.b16 %v1299, %v1294
    %v1745 = vpack.c.b16 %v1300, %v1295
    %v1746 = vpack.c.b16 %v1306, %v1301
    %v1747 = vpack.c.b16 %v1307, %v1302
    %v1748 = vpack.c.b16 %v1308, %v1303
    %v1749 = vpack.c.b16 %v1309, %v1304
    %v1750 = vpack.c.b16 %v1310, %v1305
    %v1751 = vpack.c.b16 %v1316, %v1311
    %v1752 = vpack.c.b16 %v1317, %v1312
    %v1753 = vpack.c.b16 %v1318, %v1313
    %v1754 = vpack.c.b16 %v1319, %v1314
    %v1755 = vpack.c.b16 %v1320, %v1315
    %v1756 = vpack.c.b16 %v1326, %v1321
    %v1757 = vpack.c.b16 %v1327, %v1322
    %v1758 = vpack.c.b16 %v1328, %v1323
    %v1759 = vpack.c.b16 %v1329, %v1324
    %v1760 = vpack.c.b16 %v1330, %v1325
    %v1761 = vpack.c.b16 %v1336, %v1331
    %v1762 = vpack.c.b16 %v1337, %v1332
    %v1763 = vpack.c.b16 %v1338, %v1333
    %v1764 = vpack.c.b16 %v1339, %v1334
    %v1765 = vpack.c.b16 %v1340, %v1335
    %v1766 = vpack.c.b16 %v1346, %v1341
    %v1767 = vpack.c.b16 %v1347, %v1342
    %v1768 = vpack.c.b16 %v1348, %v1343
    %v1769 = vpack.c.b16 %v1349, %v1344
    %v1770 = vpack.c.b16 %v1350, %v1345
    %v1771 = vpack.c.b16 %v1356, %v1351
    %v1772 = vpack.c.b16 %v1357, %v1352
    %v1773 = vpack.c.b16 %v1358, %v1353
    %v1774 = vpack.c.b16 %v1359, %v1354
    %v1775 = vpack.c.b16 %v1360, %v1355
    %v1776 = vpack.c.b16 %v1366, %v1361
    %v1777 = vpack.c.b16 %v1367, %v1362
    %v1778 = vpack.c.b16 %v1368, %v1363
    %v1779 = vpack.c.b16 %v1369, %v1364
    %v1780 = vpack.c.b16 %v1370, %v1365
    %v1781 = vpack.c.b16 %v1376, %v1371
    %v1782 = vpack.c.b16 %v1377, %v1372
    %v1783 = vpack.c.b16 %v1378, %v1373
    %v1784 = vpack.c.b16 %v1379, %v1374
    %v1785 = vpack.c.b16 %v1380, %v1375
    %v1786 = vpack.c.b16 %v1386, %v1381
    %v1787 = vpack.c.b16 %v1387, %v1382
    %v1788 = vpack.c.b16 %v1388, %v1383
    %v1789 = vpack.c.b16 %v1389, %v1384
    %v1790 = vpack.c.b16 %v1390, %v1385
    %v1791 = vpack.c.b16 %v1396, %v1391
    %v1792 = vpack.c.b16 %v1397, %v1392
    %v1793 = vpack.c.b16 %v1398, %v1393
    %v1794 = vpack.c.b16 %v1399, %v1394
    %v1795 = vpack.c.b16 %v1400, %v1395
    %v1796 = vpack.c.b16 %v1406, %v1401
    %v1797 = vpack.c.b16 %v1407, %v1402
    %v1798 = vpack.c.b16 %v1408, %v1403
    %v1799 = vpack.c.b16 %v1409, %v1404
    %v1800 = vpack.c.b16 %v1410, %v1405
    %v1801 = vpack.c.b16 %v1416, %v1411
    %v1802 = vpack.c.b16 %v1417, %v1412
    %v1803 = vpack.c.b16 %v1418, %v1413
    %v1804 = vpack.c.b16 %v1419, %v1414
    %v1805 = vpack.c.b16 %v1420, %v1415
    %v1806 = vpack.c.b16 %v1426, %v1421
    %v1807 = vpack.c.b16 %v1427, %v1422
    %v1808 = vpack.c.b16 %v1428, %v1423
    %v1809 = vpack.c.b16 %v1429, %v1424
    %v1810 = vpack.c.b16 %v1430, %v1425
    %v1811 = vpack.c.b16 %v1436, %v1431
    %v1812 = vpack.c.b16 %v1437, %v1432
    %v1813 = vpack.c.b16 %v1438, %v1433
    %v1814 = vpack.c.b16 %v1439, %v1434
    %v1815 = vpack.c.b16 %v1440, %v1435
    %v1816 = vpack.c.b16 %v1446, %v1441
    %v1817 = vpack.c.b16 %v1447, %v1442
    %v1818 = vpack.c.b16 %v1448, %v1443
    %v1819 = vpack.c.b16 %v1449, %v1444
    %v1820 = vpack.c.b16 %v1450, %v1445
    %v1821 = vpack.c.b16 %v1456, %v1451
    %v1822 = vpack.c.b16 %v1457, %v1452
    %v1823 = vpack.c.b16 %v1458, %v1453
    %v1824 = vpack.c.b16 %v1459, %v1454
    %v1825 = vpack.c.b16 %v1460, %v1455
    %v1826 = vpack.c.b16 %v1466, %v1461
    %v1827 = vpack.c.b16 %v1467, %v1462
    %v1828 = vpack.c.b16 %v1468, %v1463
    %v1829 = vpack.c.b16 %v1469, %v1464
    %v1830 = vpack.c.b16 %v1470, %v1465
    %v1831 = vpack.c.b16 %v1476, %v1471
    %v1832 = vpack.c.b16 %v1477, %v1472
    %v1833 = vpack.c.b16 %v1478, %v1473
    %v1834 = vpack.c.b16 %v1479, %v1474
    %v1835 = vpack.c.b16 %v1480, %v1475
    %v1836 = vpack.c.b16 %v1486, %v1481
    %v1837 = vpack.c.b16 %v1487, %v1482
    %v1838 = vpack.c.b16 %v1488, %v1483
    %v1839 = vpack.c.b16 %v1489, %v1484
    %v1840 = vpack.c.b16 %v1490, %v1485
    %v1841 = vpack.c.b16 %v1496, %v1491
    %v1842 = vpack.c.b16 %v1497, %v1492
    %v1843 = vpack.c.b16 %v1498, %v1493
    %v1844 = vpack.c.b16 %v1499, %v1494
    %v1845 = vpack.c.b16 %v1500, %v1495
    %v1846 = vpack.c.b16 %v1506, %v1501
    %v1847 = vpack.c.b16 %v1507, %v1502
    %v1848 = vpack.c.b16 %v1508, %v1503
    %v1849 = vpack.c.b16 %v1509, %v1504
    %v1850 = vpack.c.b16 %v1510, %v1505
    %v1851 = vpack.c.b16 %v1516, %v1511
    %v1852 = vpack.c.b16 %v1517, %v1512
    %v1853 = vpack.c.b16 %v1518, %v1513
    %v1854 = vpack.c.b16 %v1519, %v1514
    %v1855 = vpack.c.b16 %v1520, %v1515
    %v1856 = vpack.c.b16 %v1526, %v1521
    %v1857 = vpack.c.b16 %v1527, %v1522
    %v1858 = vpack.c.b16 %v1528, %v1523
    %v1859 = vpack.c.b16 %v1529, %v1524
    %v1860 = vpack.c.b16 %v1530, %v1525
    %v1861 = vpack.c.b16 %v1536, %v1531
    %v1862 = vpack.c.b16 %v1537, %v1532
    %v1863 = vpack.c.b16 %v1538, %v1533
    %v1864 = vpack.c.b16 %v1539, %v1534
    %v1865 = vpack.c.b16 %v1540, %v1535
    %v1866 = vpack.c.b16 %v1546, %v1541
    %v1867 = vpack.c.b16 %v1547, %v1542
    %v1868 = vpack.c.b16 %v1548, %v1543
    %v1869 = vpack.c.b16 %v1549, %v1544
    %v1870 = vpack.c.b16 %v1550, %v1545
    %2191 = vmatprep.subr.bf16.mxu0 %v1587
    %2192 = vmatpush1.bf16.msra.mxu0 %v1586
    %2193 = vmatprep.subr.bf16.mxu0 %v1582
    %2194 = vmatpush1.bf16.msra.mxu0 %v1581
    %2195 = vmatprep.subr.bf16.mxu0 %v1577
    %2196 = vmatpush1.bf16.msra.mxu0 %v1576
    %2197 = vmatprep.subr.bf16.mxu0 %v1572
    %2198 = vmatpush1.bf16.msra.mxu0 %v1571
    %2199 = vmatprep.subr.bf16.mxu0 %v1567
    %2200 = vmatpush1.bf16.msra.mxu0 %v1566
    %2201 = vmatprep.subr.bf16.mxu0 %v1562
    %2202 = vmatpush1.bf16.msra.mxu0 %v1561
    %2203 = vmatprep.subr.bf16.mxu0 %v1557
    %2204 = vmatpush1.bf16.msra.mxu0 %v1556
    %2205 = vmatprep.subr.bf16.mxu0 %v1552
    %2206 = vmatpush1.bf16.msra.mxu0 %v1551
    %2207 = vmatprep.subr.bf16.mxu0 %v1627
    %2208 = vmatpush2.bf16.msra.mxu0 %v1626
    %2209 = vmatprep.subr.bf16.mxu0 %v1622
    %2210 = vmatpush2.bf16.msra.mxu0 %v1621
    %2211 = vmatprep.subr.bf16.mxu0 %v1617
    %2212 = vmatpush2.bf16.msra.mxu0 %v1616
    %2213 = vmatprep.subr.bf16.mxu0 %v1612
    %2214 = vmatpush2.bf16.msra.mxu0 %v1611
    %2215 = vmatprep.subr.bf16.mxu0 %v1607
    %2216 = vmatpush2.bf16.msra.mxu0 %v1606
    %2217 = vmatprep.subr.bf16.mxu0 %v1602
    %2218 = vmatpush2.bf16.msra.mxu0 %v1601
    %2219 = vmatprep.subr.bf16.mxu0 %v1597
    %2220 = vmatpush2.bf16.msra.mxu0 %v1596
    %2221 = vmatprep.subr.bf16.mxu0 %v1592
    %2222 = vmatpush2.bf16.msra.mxu0 %v1591
    %2223 = vmatprep.mubr.bf16.mxu0 %v512
    %2224 = vmatmul.mubr.bf16.gmra.mxu0 %v511
    %v2225 = vpop.f32.mrf.mxu0
    %v2226 = vadd.f32 0.0, %v2225
    %v2227 = vpop.f32.mrf.mxu0
    %v2228 = vadd.f32 0.0, %v2227
    %v2229 = vpop.f32.mrf.mxu0
    %v2230 = vadd.f32 0.0, %v2229
    %v2231 = vpop.f32.mrf.mxu0
    %v2232 = vadd.f32 0.0, %v2231
    %2233 = vdwg.mxu0
    %2234 = vmatprep.subr.bf16.mxu0 %v1667
    %2235 = vmatpush1.bf16.msra.mxu0 %v1666
    %2236 = vmatprep.subr.bf16.mxu0 %v1662
    %2237 = vmatpush1.bf16.msra.mxu0 %v1661
    %2238 = vmatprep.subr.bf16.mxu0 %v1657
    %2239 = vmatpush1.bf16.msra.mxu0 %v1656
    %2240 = vmatprep.subr.bf16.mxu0 %v1652
    %2241 = vmatpush1.bf16.msra.mxu0 %v1651
    %2242 = vmatprep.subr.bf16.mxu0 %v1647
    %2243 = vmatpush1.bf16.msra.mxu0 %v1646
    %2244 = vmatprep.subr.bf16.mxu0 %v1642
    %2245 = vmatpush1.bf16.msra.mxu0 %v1641
    %2246 = vmatprep.subr.bf16.mxu0 %v1637
    %2247 = vmatpush1.bf16.msra.mxu0 %v1636
    %2248 = vmatprep.subr.bf16.mxu0 %v1632
    %2249 = vmatpush1.bf16.msra.mxu0 %v1631
    %2250 = vmatprep.subr.bf16.mxu0 %v1707
    %2251 = vmatpush2.bf16.msra.mxu0 %v1706
    %2252 = vmatprep.subr.bf16.mxu0 %v1702
    %2253 = vmatpush2.bf16.msra.mxu0 %v1701
    %2254 = vmatprep.subr.bf16.mxu0 %v1697
    %2255 = vmatpush2.bf16.msra.mxu0 %v1696
    %2256 = vmatprep.subr.bf16.mxu0 %v1692
    %2257 = vmatpush2.bf16.msra.mxu0 %v1691
    %2258 = vmatprep.subr.bf16.mxu0 %v1687
    %2259 = vmatpush2.bf16.msra.mxu0 %v1686
    %2260 = vmatprep.subr.bf16.mxu0 %v1682
    %2261 = vmatpush2.bf16.msra.mxu0 %v1681
    %2262 = vmatprep.subr.bf16.mxu0 %v1677
    %2263 = vmatpush2.bf16.msra.mxu0 %v1676
    %2264 = vmatprep.subr.bf16.mxu0 %v1672
    %2265 = vmatpush2.bf16.msra.mxu0 %v1671
    %2266 = vmatprep.mubr.bf16.mxu0 %v514
    %2267 = vmatmul.mubr.bf16.gmra.mxu0 %v513
    %v2268 = vpop.f32.mrf.mxu0
    %v2269 = vadd.f32 %v2226, %v2268
    %v2270 = vpop.f32.mrf.mxu0
    %v2271 = vadd.f32 %v2228, %v2270
    %v2272 = vpop.f32.mrf.mxu0
    %v2273 = vadd.f32 %v2230, %v2272
    %v2274 = vpop.f32.mrf.mxu0
    %v2275 = vadd.f32 %v2232, %v2274
    %2276 = vdwg.mxu0
    %2277 = vmatprep.subr.bf16.mxu0 %v1747
    %2278 = vmatpush1.bf16.msra.mxu0 %v1746
    %2279 = vmatprep.subr.bf16.mxu0 %v1742
    %2280 = vmatpush1.bf16.msra.mxu0 %v1741
    %2281 = vmatprep.subr.bf16.mxu0 %v1737
    %2282 = vmatpush1.bf16.msra.mxu0 %v1736
    %2283 = vmatprep.subr.bf16.mxu0 %v1732
    %2284 = vmatpush1.bf16.msra.mxu0 %v1731
    %2285 = vmatprep.subr.bf16.mxu0 %v1727
    %2286 = vmatpush1.bf16.msra.mxu0 %v1726
    %2287 = vmatprep.subr.bf16.mxu0 %v1722
    %2288 = vmatpush1.bf16.msra.mxu0 %v1721
    %2289 = vmatprep.subr.bf16.mxu0 %v1717
    %2290 = vmatpush1.bf16.msra.mxu0 %v1716
    %2291 = vmatprep.subr.bf16.mxu0 %v1712
    %2292 = vmatpush1.bf16.msra.mxu0 %v1711
    %2293 = vmatprep.subr.bf16.mxu0 %v1787
    %2294 = vmatpush2.bf16.msra.mxu0 %v1786
    %2295 = vmatprep.subr.bf16.mxu0 %v1782
    %2296 = vmatpush2.bf16.msra.mxu0 %v1781
    %2297 = vmatprep.subr.bf16.mxu0 %v1777
    %2298 = vmatpush2.bf16.msra.mxu0 %v1776
    %2299 = vmatprep.subr.bf16.mxu0 %v1772
    %2300 = vmatpush2.bf16.msra.mxu0 %v1771
    %2301 = vmatprep.subr.bf16.mxu0 %v1767
    %2302 = vmatpush2.bf16.msra.mxu0 %v1766
    %2303 = vmatprep.subr.bf16.mxu0 %v1762
    %2304 = vmatpush2.bf16.msra.mxu0 %v1761
    %2305 = vmatprep.subr.bf16.mxu0 %v1757
    %2306 = vmatpush2.bf16.msra.mxu0 %v1756
    %2307 = vmatprep.subr.bf16.mxu0 %v1752
    %2308 = vmatpush2.bf16.msra.mxu0 %v1751
    %2309 = vmatprep.mubr.bf16.mxu0 %v516
    %2310 = vmatmul.mubr.bf16.gmra.mxu0 %v515
    %v2311 = vpop.f32.mrf.mxu0
    %v2312 = vadd.f32 %v2269, %v2311
    %v2313 = vpop.f32.mrf.mxu0
    %v2314 = vadd.f32 %v2271, %v2313
    %v2315 = vpop.f32.mrf.mxu0
    %v2316 = vadd.f32 %v2273, %v2315
    %v2317 = vpop.f32.mrf.mxu0
    %v2318 = vadd.f32 %v2275, %v2317
    %2319 = vdwg.mxu0
    %2320 = vmatprep.subr.bf16.mxu0 %v1827
    %2321 = vmatpush1.bf16.msra.mxu0 %v1826
    %2322 = vmatprep.subr.bf16.mxu0 %v1822
    %2323 = vmatpush1.bf16.msra.mxu0 %v1821
    %2324 = vmatprep.subr.bf16.mxu0 %v1817
    %2325 = vmatpush1.bf16.msra.mxu0 %v1816
    %2326 = vmatprep.subr.bf16.mxu0 %v1812
    %2327 = vmatpush1.bf16.msra.mxu0 %v1811
    %2328 = vmatprep.subr.bf16.mxu0 %v1807
    %2329 = vmatpush1.bf16.msra.mxu0 %v1806
    %2330 = vmatprep.subr.bf16.mxu0 %v1802
    %2331 = vmatpush1.bf16.msra.mxu0 %v1801
    %2332 = vmatprep.subr.bf16.mxu0 %v1797
    %2333 = vmatpush1.bf16.msra.mxu0 %v1796
    %2334 = vmatprep.subr.bf16.mxu0 %v1792
    %2335 = vmatpush1.bf16.msra.mxu0 %v1791
    %2336 = vmatprep.subr.bf16.mxu0 %v1867
    %2337 = vmatpush2.bf16.msra.mxu0 %v1866
    %2338 = vmatprep.subr.bf16.mxu0 %v1862
    %2339 = vmatpush2.bf16.msra.mxu0 %v1861
    %2340 = vmatprep.subr.bf16.mxu0 %v1857
    %2341 = vmatpush2.bf16.msra.mxu0 %v1856
    %2342 = vmatprep.subr.bf16.mxu0 %v1852
    %2343 = vmatpush2.bf16.msra.mxu0 %v1851
    %2344 = vmatprep.subr.bf16.mxu0 %v1847
    %2345 = vmatpush2.bf16.msra.mxu0 %v1846
    %2346 = vmatprep.subr.bf16.mxu0 %v1842
    %2347 = vmatpush2.bf16.msra.mxu0 %v1841
    %2348 = vmatprep.subr.bf16.mxu0 %v1837
    %2349 = vmatpush2.bf16.msra.mxu0 %v1836
    %2350 = vmatprep.subr.bf16.mxu0 %v1832
    %2351 = vmatpush2.bf16.msra.mxu0 %v1831
    %2352 = vmatprep.mubr.bf16.mxu0 %v518
    %2353 = vmatmul.mubr.bf16.gmra.mxu0 %v517
    %v2354 = vpop.f32.mrf.mxu0
    %v2355 = vadd.f32 %v2312, %v2354
    %v2356 = vpop.f32.mrf.mxu0
    %v2357 = vadd.f32 %v2314, %v2356
    %v2358 = vpop.f32.mrf.mxu0
    %v2359 = vadd.f32 %v2316, %v2358
    %v2360 = vpop.f32.mrf.mxu0
    %v2361 = vadd.f32 %v2318, %v2360
    %2362 = vdwg.mxu0
    %2363 = vmatprep.subr.bf16.mxu0 %v1589
    %2364 = vmatpush1.bf16.msra.mxu0 %v1588
    %2365 = vmatprep.subr.bf16.mxu0 %v1584
    %2366 = vmatpush1.bf16.msra.mxu0 %v1583
    %2367 = vmatprep.subr.bf16.mxu0 %v1579
    %2368 = vmatpush1.bf16.msra.mxu0 %v1578
    %2369 = vmatprep.subr.bf16.mxu0 %v1574
    %2370 = vmatpush1.bf16.msra.mxu0 %v1573
    %2371 = vmatprep.subr.bf16.mxu0 %v1569
    %2372 = vmatpush1.bf16.msra.mxu0 %v1568
    %2373 = vmatprep.subr.bf16.mxu0 %v1564
    %2374 = vmatpush1.bf16.msra.mxu0 %v1563
    %2375 = vmatprep.subr.bf16.mxu0 %v1559
    %2376 = vmatpush1.bf16.msra.mxu0 %v1558
    %2377 = vmatprep.subr.bf16.mxu0 %v1554
    %2378 = vmatpush1.bf16.msra.mxu0 %v1553
    %2379 = vmatprep.subr.bf16.mxu0 %v1629
    %2380 = vmatpush2.bf16.msra.mxu0 %v1628
    %2381 = vmatprep.subr.bf16.mxu0 %v1624
    %2382 = vmatpush2.bf16.msra.mxu0 %v1623
    %2383 = vmatprep.subr.bf16.mxu0 %v1619
    %2384 = vmatpush2.bf16.msra.mxu0 %v1618
    %2385 = vmatprep.subr.bf16.mxu0 %v1614
    %2386 = vmatpush2.bf16.msra.mxu0 %v1613
    %2387 = vmatprep.subr.bf16.mxu0 %v1609
    %2388 = vmatpush2.bf16.msra.mxu0 %v1608
    %2389 = vmatprep.subr.bf16.mxu0 %v1604
    %2390 = vmatpush2.bf16.msra.mxu0 %v1603
    %2391 = vmatprep.subr.bf16.mxu0 %v1599
    %2392 = vmatpush2.bf16.msra.mxu0 %v1598
    %2393 = vmatprep.subr.bf16.mxu0 %v1594
    %2394 = vmatpush2.bf16.msra.mxu0 %v1593
    %2395 = vmatprep.mubr.bf16.mxu0 %v512
    %2396 = vmatmul.mubr.bf16.gmra.mxu0 %v511
    %v2397 = vpop.f32.mrf.mxu0
    %v2398 = vadd.f32 0.0, %v2397
    %v2399 = vpop.f32.mrf.mxu0
    %v2400 = vadd.f32 0.0, %v2399
    %v2401 = vpop.f32.mrf.mxu0
    %v2402 = vadd.f32 0.0, %v2401
    %v2403 = vpop.f32.mrf.mxu0
    %v2404 = vadd.f32 0.0, %v2403
    %2405 = vdwg.mxu0
    %2406 = vmatprep.subr.bf16.mxu0 %v1669
    %2407 = vmatpush1.bf16.msra.mxu0 %v1668
    %2408 = vmatprep.subr.bf16.mxu0 %v1664
    %2409 = vmatpush1.bf16.msra.mxu0 %v1663
    %2410 = vmatprep.subr.bf16.mxu0 %v1659
    %2411 = vmatpush1.bf16.msra.mxu0 %v1658
    %2412 = vmatprep.subr.bf16.mxu0 %v1654
    %2413 = vmatpush1.bf16.msra.mxu0 %v1653
    %2414 = vmatprep.subr.bf16.mxu0 %v1649
    %2415 = vmatpush1.bf16.msra.mxu0 %v1648
    %2416 = vmatprep.subr.bf16.mxu0 %v1644
    %2417 = vmatpush1.bf16.msra.mxu0 %v1643
    %2418 = vmatprep.subr.bf16.mxu0 %v1639
    %2419 = vmatpush1.bf16.msra.mxu0 %v1638
    %2420 = vmatprep.subr.bf16.mxu0 %v1634
    %2421 = vmatpush1.bf16.msra.mxu0 %v1633
    %2422 = vmatprep.subr.bf16.mxu0 %v1709
    %2423 = vmatpush2.bf16.msra.mxu0 %v1708
    %2424 = vmatprep.subr.bf16.mxu0 %v1704
    %2425 = vmatpush2.bf16.msra.mxu0 %v1703
    %2426 = vmatprep.subr.bf16.mxu0 %v1699
    %2427 = vmatpush2.bf16.msra.mxu0 %v1698
    %2428 = vmatprep.subr.bf16.mxu0 %v1694
    %2429 = vmatpush2.bf16.msra.mxu0 %v1693
    %2430 = vmatprep.subr.bf16.mxu0 %v1689
    %2431 = vmatpush2.bf16.msra.mxu0 %v1688
    %2432 = vmatprep.subr.bf16.mxu0 %v1684
    %2433 = vmatpush2.bf16.msra.mxu0 %v1683
    %2434 = vmatprep.subr.bf16.mxu0 %v1679
    %2435 = vmatpush2.bf16.msra.mxu0 %v1678
    %2436 = vmatprep.subr.bf16.mxu0 %v1674
    %2437 = vmatpush2.bf16.msra.mxu0 %v1673
    %2438 = vmatprep.mubr.bf16.mxu0 %v514
    %2439 = vmatmul.mubr.bf16.gmra.mxu0 %v513
    %v2440 = vpop.f32.mrf.mxu0
    %v2441 = vadd.f32 %v2398, %v2440
    %v2442 = vpop.f32.mrf.mxu0
    %v2443 = vadd.f32 %v2400, %v2442
    %v2444 = vpop.f32.mrf.mxu0
    %v2445 = vadd.f32 %v2402, %v2444
    %v2446 = vpop.f32.mrf.mxu0
    %v2447 = vadd.f32 %v2404, %v2446
    %2448 = vdwg.mxu0
    %2449 = vmatprep.subr.bf16.mxu0 %v1749
    %2450 = vmatpush1.bf16.msra.mxu0 %v1748
    %2451 = vmatprep.subr.bf16.mxu0 %v1744
    %2452 = vmatpush1.bf16.msra.mxu0 %v1743
    %2453 = vmatprep.subr.bf16.mxu0 %v1739
    %2454 = vmatpush1.bf16.msra.mxu0 %v1738
    %2455 = vmatprep.subr.bf16.mxu0 %v1734
    %2456 = vmatpush1.bf16.msra.mxu0 %v1733
    %2457 = vmatprep.subr.bf16.mxu0 %v1729
    %2458 = vmatpush1.bf16.msra.mxu0 %v1728
    %2459 = vmatprep.subr.bf16.mxu0 %v1724
    %2460 = vmatpush1.bf16.msra.mxu0 %v1723
    %2461 = vmatprep.subr.bf16.mxu0 %v1719
    %2462 = vmatpush1.bf16.msra.mxu0 %v1718
    %2463 = vmatprep.subr.bf16.mxu0 %v1714
    %2464 = vmatpush1.bf16.msra.mxu0 %v1713
    %2465 = vmatprep.subr.bf16.mxu0 %v1789
    %2466 = vmatpush2.bf16.msra.mxu0 %v1788
    %2467 = vmatprep.subr.bf16.mxu0 %v1784
    %2468 = vmatpush2.bf16.msra.mxu0 %v1783
    %2469 = vmatprep.subr.bf16.mxu0 %v1779
    %2470 = vmatpush2.bf16.msra.mxu0 %v1778
    %2471 = vmatprep.subr.bf16.mxu0 %v1774
    %2472 = vmatpush2.bf16.msra.mxu0 %v1773
    %2473 = vmatprep.subr.bf16.mxu0 %v1769
    %2474 = vmatpush2.bf16.msra.mxu0 %v1768
    %2475 = vmatprep.subr.bf16.mxu0 %v1764
    %2476 = vmatpush2.bf16.msra.mxu0 %v1763
    %2477 = vmatprep.subr.bf16.mxu0 %v1759
    %2478 = vmatpush2.bf16.msra.mxu0 %v1758
    %2479 = vmatprep.subr.bf16.mxu0 %v1754
    %2480 = vmatpush2.bf16.msra.mxu0 %v1753
    %2481 = vmatprep.mubr.bf16.mxu0 %v516
    %2482 = vmatmul.mubr.bf16.gmra.mxu0 %v515
    %v2483 = vpop.f32.mrf.mxu0
    %v2484 = vadd.f32 %v2441, %v2483
    %v2485 = vpop.f32.mrf.mxu0
    %v2486 = vadd.f32 %v2443, %v2485
    %v2487 = vpop.f32.mrf.mxu0
    %v2488 = vadd.f32 %v2445, %v2487
    %v2489 = vpop.f32.mrf.mxu0
    %v2490 = vadd.f32 %v2447, %v2489
    %2491 = vdwg.mxu0
    %2492 = vmatprep.subr.bf16.mxu0 %v1829
    %2493 = vmatpush1.bf16.msra.mxu0 %v1828
    %2494 = vmatprep.subr.bf16.mxu0 %v1824
    %2495 = vmatpush1.bf16.msra.mxu0 %v1823
    %2496 = vmatprep.subr.bf16.mxu0 %v1819
    %2497 = vmatpush1.bf16.msra.mxu0 %v1818
    %2498 = vmatprep.subr.bf16.mxu0 %v1814
    %2499 = vmatpush1.bf16.msra.mxu0 %v1813
    %2500 = vmatprep.subr.bf16.mxu0 %v1809
    %2501 = vmatpush1.bf16.msra.mxu0 %v1808
    %2502 = vmatprep.subr.bf16.mxu0 %v1804
    %2503 = vmatpush1.bf16.msra.mxu0 %v1803
    %2504 = vmatprep.subr.bf16.mxu0 %v1799
    %2505 = vmatpush1.bf16.msra.mxu0 %v1798
    %2506 = vmatprep.subr.bf16.mxu0 %v1794
    %2507 = vmatpush1.bf16.msra.mxu0 %v1793
    %2508 = vmatprep.subr.bf16.mxu0 %v1869
    %2509 = vmatpush2.bf16.msra.mxu0 %v1868
    %2510 = vmatprep.subr.bf16.mxu0 %v1864
    %2511 = vmatpush2.bf16.msra.mxu0 %v1863
    %2512 = vmatprep.subr.bf16.mxu0 %v1859
    %2513 = vmatpush2.bf16.msra.mxu0 %v1858
    %2514 = vmatprep.subr.bf16.mxu0 %v1854
    %2515 = vmatpush2.bf16.msra.mxu0 %v1853
    %2516 = vmatprep.subr.bf16.mxu0 %v1849
    %2517 = vmatpush2.bf16.msra.mxu0 %v1848
    %2518 = vmatprep.subr.bf16.mxu0 %v1844
    %2519 = vmatpush2.bf16.msra.mxu0 %v1843
    %2520 = vmatprep.subr.bf16.mxu0 %v1839
    %2521 = vmatpush2.bf16.msra.mxu0 %v1838
    %2522 = vmatprep.subr.bf16.mxu0 %v1834
    %2523 = vmatpush2.bf16.msra.mxu0 %v1833
    %2524 = vmatprep.mubr.bf16.mxu0 %v518
    %2525 = vmatmul.mubr.bf16.gmra.mxu0 %v517
    %v2526 = vpop.f32.mrf.mxu0
    %v2527 = vadd.f32 %v2484, %v2526
    %v2528 = vpop.f32.mrf.mxu0
    %v2529 = vadd.f32 %v2486, %v2528
    %v2530 = vpop.f32.mrf.mxu0
    %v2531 = vadd.f32 %v2488, %v2530
    %v2532 = vpop.f32.mrf.mxu0
    %v2533 = vadd.f32 %v2490, %v2532
    %2534 = vdwg.mxu0
    %2535 = vmatprep.subr.bf16.mxu0 0
    %2536 = vmatpush1.bf16.msra.mxu0 %v1590
    %2537 = vmatprep.subr.bf16.mxu0 0
    %2538 = vmatpush1.bf16.msra.mxu0 %v1585
    %2539 = vmatprep.subr.bf16.mxu0 0
    %2540 = vmatpush1.bf16.msra.mxu0 %v1580
    %2541 = vmatprep.subr.bf16.mxu0 0
    %2542 = vmatpush1.bf16.msra.mxu0 %v1575
    %2543 = vmatprep.subr.bf16.mxu0 0
    %2544 = vmatpush1.bf16.msra.mxu0 %v1570
    %2545 = vmatprep.subr.bf16.mxu0 0
    %2546 = vmatpush1.bf16.msra.mxu0 %v1565
    %2547 = vmatprep.subr.bf16.mxu0 0
    %2548 = vmatpush1.bf16.msra.mxu0 %v1560
    %2549 = vmatprep.subr.bf16.mxu0 0
    %2550 = vmatpush1.bf16.msra.mxu0 %v1555
    %2551 = vmatprep.subr.bf16.mxu0 0
    %2552 = vmatpush2.bf16.msra.mxu0 %v1630
    %2553 = vmatprep.subr.bf16.mxu0 0
    %2554 = vmatpush2.bf16.msra.mxu0 %v1625
    %2555 = vmatprep.subr.bf16.mxu0 0
    %2556 = vmatpush2.bf16.msra.mxu0 %v1620
    %2557 = vmatprep.subr.bf16.mxu0 0
    %2558 = vmatpush2.bf16.msra.mxu0 %v1615
    %2559 = vmatprep.subr.bf16.mxu0 0
    %2560 = vmatpush2.bf16.msra.mxu0 %v1610
    %2561 = vmatprep.subr.bf16.mxu0 0
    %2562 = vmatpush2.bf16.msra.mxu0 %v1605
    %2563 = vmatprep.subr.bf16.mxu0 0
    %2564 = vmatpush2.bf16.msra.mxu0 %v1600
    %2565 = vmatprep.subr.bf16.mxu0 0
    %2566 = vmatpush2.bf16.msra.mxu0 %v1595
    %2567 = vmatprep.mubr.bf16.mxu0 %v512
    %2568 = vmatmul.mubr.bf16.gmra.mxu0 %v511
    %v2569 = vpop.f32.mrf.mxu0
    %v2570 = vadd.f32 0.0, %v2569
    %v2571 = vpop.f32.mrf.mxu0
    %v2572 = vpop.f32.mrf.mxu0
    %v2573 = vadd.f32 0.0, %v2572
    %v2574 = vpop.f32.mrf.mxu0
    %2575 = vdwg.mxu0
    %2576 = vmatprep.subr.bf16.mxu0 0
    %2577 = vmatpush1.bf16.msra.mxu0 %v1670
    %2578 = vmatprep.subr.bf16.mxu0 0
    %2579 = vmatpush1.bf16.msra.mxu0 %v1665
    %2580 = vmatprep.subr.bf16.mxu0 0
    %2581 = vmatpush1.bf16.msra.mxu0 %v1660
    %2582 = vmatprep.subr.bf16.mxu0 0
    %2583 = vmatpush1.bf16.msra.mxu0 %v1655
    %2584 = vmatprep.subr.bf16.mxu0 0
    %2585 = vmatpush1.bf16.msra.mxu0 %v1650
    %2586 = vmatprep.subr.bf16.mxu0 0
    %2587 = vmatpush1.bf16.msra.mxu0 %v1645
    %2588 = vmatprep.subr.bf16.mxu0 0
    %2589 = vmatpush1.bf16.msra.mxu0 %v1640
    %2590 = vmatprep.subr.bf16.mxu0 0
    %2591 = vmatpush1.bf16.msra.mxu0 %v1635
    %2592 = vmatprep.subr.bf16.mxu0 0
    %2593 = vmatpush2.bf16.msra.mxu0 %v1710
    %2594 = vmatprep.subr.bf16.mxu0 0
    %2595 = vmatpush2.bf16.msra.mxu0 %v1705
    %2596 = vmatprep.subr.bf16.mxu0 0
    %2597 = vmatpush2.bf16.msra.mxu0 %v1700
    %2598 = vmatprep.subr.bf16.mxu0 0
    %2599 = vmatpush2.bf16.msra.mxu0 %v1695
    %2600 = vmatprep.subr.bf16.mxu0 0
    %2601 = vmatpush2.bf16.msra.mxu0 %v1690
    %2602 = vmatprep.subr.bf16.mxu0 0
    %2603 = vmatpush2.bf16.msra.mxu0 %v1685
    %2604 = vmatprep.subr.bf16.mxu0 0
    %2605 = vmatpush2.bf16.msra.mxu0 %v1680
    %2606 = vmatprep.subr.bf16.mxu0 0
    %2607 = vmatpush2.bf16.msra.mxu0 %v1675
    %2608 = vmatprep.mubr.bf16.mxu0 %v514
    %2609 = vmatmul.mubr.bf16.gmra.mxu0 %v513
    %v2610 = vpop.f32.mrf.mxu0
    %v2611 = vadd.f32 %v2570, %v2610
    %v2612 = vpop.f32.mrf.mxu0
    %v2613 = vpop.f32.mrf.mxu0
    %v2614 = vadd.f32 %v2573, %v2613
    %v2615 = vpop.f32.mrf.mxu0
    %2616 = vdwg.mxu0
    %2617 = vmatprep.subr.bf16.mxu0 0
    %2618 = vmatpush1.bf16.msra.mxu0 %v1750
    %2619 = vmatprep.subr.bf16.mxu0 0
    %2620 = vmatpush1.bf16.msra.mxu0 %v1745
    %2621 = vmatprep.subr.bf16.mxu0 0
    %2622 = vmatpush1.bf16.msra.mxu0 %v1740
    %2623 = vmatprep.subr.bf16.mxu0 0
    %2624 = vmatpush1.bf16.msra.mxu0 %v1735
    %2625 = vmatprep.subr.bf16.mxu0 0
    %2626 = vmatpush1.bf16.msra.mxu0 %v1730
    %2627 = vmatprep.subr.bf16.mxu0 0
    %2628 = vmatpush1.bf16.msra.mxu0 %v1725
    %2629 = vmatprep.subr.bf16.mxu0 0
    %2630 = vmatpush1.bf16.msra.mxu0 %v1720
    %2631 = vmatprep.subr.bf16.mxu0 0
    %2632 = vmatpush1.bf16.msra.mxu0 %v1715
    %2633 = vmatprep.subr.bf16.mxu0 0
    %2634 = vmatpush2.bf16.msra.mxu0 %v1790
    %2635 = vmatprep.subr.bf16.mxu0 0
    %2636 = vmatpush2.bf16.msra.mxu0 %v1785
    %2637 = vmatprep.subr.bf16.mxu0 0
    %2638 = vmatpush2.bf16.msra.mxu0 %v1780
    %2639 = vmatprep.subr.bf16.mxu0 0
    %2640 = vmatpush2.bf16.msra.mxu0 %v1775
    %2641 = vmatprep.subr.bf16.mxu0 0
    %2642 = vmatpush2.bf16.msra.mxu0 %v1770
    %2643 = vmatprep.subr.bf16.mxu0 0
    %2644 = vmatpush2.bf16.msra.mxu0 %v1765
    %2645 = vmatprep.subr.bf16.mxu0 0
    %2646 = vmatpush2.bf16.msra.mxu0 %v1760
    %2647 = vmatprep.subr.bf16.mxu0 0
    %2648 = vmatpush2.bf16.msra.mxu0 %v1755
    %2649 = vmatprep.mubr.bf16.mxu0 %v516
    %2650 = vmatmul.mubr.bf16.gmra.mxu0 %v515
    %v2651 = vpop.f32.mrf.mxu0
    %v2652 = vadd.f32 %v2611, %v2651
    %v2653 = vpop.f32.mrf.mxu0
    %v2654 = vpop.f32.mrf.mxu0
    %v2655 = vadd.f32 %v2614, %v2654
    %v2656 = vpop.f32.mrf.mxu0
    %2657 = vdwg.mxu0
    %2658 = vmatprep.subr.bf16.mxu0 0
    %2659 = vmatpush1.bf16.msra.mxu0 %v1830
    %2660 = vmatprep.subr.bf16.mxu0 0
    %2661 = vmatpush1.bf16.msra.mxu0 %v1825
    %2662 = vmatprep.subr.bf16.mxu0 0
    %2663 = vmatpush1.bf16.msra.mxu0 %v1820
    %2664 = vmatprep.subr.bf16.mxu0 0
    %2665 = vmatpush1.bf16.msra.mxu0 %v1815
    %2666 = vmatprep.subr.bf16.mxu0 0
    %2667 = vmatpush1.bf16.msra.mxu0 %v1810
    %2668 = vmatprep.subr.bf16.mxu0 0
    %2669 = vmatpush1.bf16.msra.mxu0 %v1805
    %2670 = vmatprep.subr.bf16.mxu0 0
    %2671 = vmatpush1.bf16.msra.mxu0 %v1800
    %2672 = vmatprep.subr.bf16.mxu0 0
    %2673 = vmatpush1.bf16.msra.mxu0 %v1795
    %2674 = vmatprep.subr.bf16.mxu0 0
    %2675 = vmatpush2.bf16.msra.mxu0 %v1870
    %2676 = vmatprep.subr.bf16.mxu0 0
    %2677 = vmatpush2.bf16.msra.mxu0 %v1865
    %2678 = vmatprep.subr.bf16.mxu0 0
    %2679 = vmatpush2.bf16.msra.mxu0 %v1860
    %2680 = vmatprep.subr.bf16.mxu0 0
    %2681 = vmatpush2.bf16.msra.mxu0 %v1855
    %2682 = vmatprep.subr.bf16.mxu0 0
    %2683 = vmatpush2.bf16.msra.mxu0 %v1850
    %2684 = vmatprep.subr.bf16.mxu0 0
    %2685 = vmatpush2.bf16.msra.mxu0 %v1845
    %2686 = vmatprep.subr.bf16.mxu0 0
    %2687 = vmatpush2.bf16.msra.mxu0 %v1840
    %2688 = vmatprep.subr.bf16.mxu0 0
    %2689 = vmatpush2.bf16.msra.mxu0 %v1835
    %2690 = vmatprep.mubr.bf16.mxu0 %v518
    %2691 = vmatmul.mubr.bf16.gmra.mxu0 %v517
    %v2692 = vpop.f32.mrf.mxu0
    %v2693 = vadd.f32 %v2652, %v2692
    %v2694 = vpop.f32.mrf.mxu0
    %v2695 = vpop.f32.mrf.mxu0
    %v2696 = vadd.f32 %v2655, %v2695
    %v2697 = vpop.f32.mrf.mxu0
    %2698 = vdwg.mxu0
    %v2699 = vadd.f32 %v85, %v2355
    %v2700 = vadd.f32 %v86, %v2357
    %v2701 = vadd.f32 %v87, %v2527
    %v2702 = vadd.f32 %v88, %v2529
    %v2703 = vadd.f32 %v89, %v2693
    %v2704 = vadd.f32 %v90, %v2359
    %v2705 = vadd.f32 %v91, %v2361
    %v2706 = vadd.f32 %v92, %v2531
    %v2707 = vadd.f32 %v93, %v2533
    %v2708 = vadd.f32 %v94, %v2696
    %2709 = vst [vmem:[#allocation2] sm:$0xff] %v2699
    %2710 = vst [vmem:[#allocation2 + $0x8] sm:$0xff] %v2700
    %2711 = vst [vmem:[#allocation2 + $0x10] sm:$0xff] %v2701
    %2712 = vst [vmem:[#allocation2 + $0x18] sm:$0xff] %v2702
    %2713 = vst [vmem:[#allocation2 + $0x20] sm:$0xff] %v2703
    %2714 = vst [vmem:[#allocation2 + $0x28] sm:$0xff] %v2704
    %2715 = vst [vmem:[#allocation2 + $0x30] sm:$0xff] %v2705
    %2716 = vst [vmem:[#allocation2 + $0x38] sm:$0xff] %v2706
    %2717 = vst [vmem:[#allocation2 + $0x40] sm:$0xff] %v2707
    %2718 = vst [vmem:[#allocation2 + $0x48] sm:$0xff] %v2708
    // Predicated region
    $region38: #{finetune_panns_forward.1} parent=1 // pred_check
      %p2719 = pneg %p71
    $region39: #{finetune_panns_forward.1} parent=1 // pred_check_branch
      %2721 = sbr.rel (%p2719) target = $region41
    $region40: #{finetune_panns_forward.1} parent=1 // pred_region
      %v2722 = vld [vmem:[#allocation2] sm:$0xff]
      %v2723 = vld [vmem:[#allocation2 + $0x8] sm:$0xff]
      %v2724 = vld [vmem:[#allocation2 + $0x10] sm:$0xff]
      %v2725 = vld [vmem:[#allocation2 + $0x18] sm:$0xff]
      %v2726 = vld [vmem:[#allocation2 + $0x20] sm:$0xff]
      %v2727 = vld [vmem:[#allocation2 + $0x28] sm:$0xff]
      %v2728 = vld [vmem:[#allocation2 + $0x30] sm:$0xff]
      %v2729 = vld [vmem:[#allocation2 + $0x38] sm:$0xff]
      %v2730 = vld [vmem:[#allocation2 + $0x40] sm:$0xff]
      %v2731 = vld [vmem:[#allocation2 + $0x48] sm:$0xff]
      %v2732 = vpack.c.bf16 %v2727, %v2722
      %v2733 = vpack.c.bf16 %v2728, %v2723
      %v2734 = vpack.c.bf16 %v2729, %v2724
      %v2735 = vpack.c.bf16 %v2730, %v2725
      %v2736 = vpack.c.bf16 %v2731, %v2726
      %v2737 = vld [vmem:[#allocation7] sm:$0xf]
      %v2738 = vld [vmem:[#allocation7 + $0x4] sm:$0xf]
      %v2739 = vld [vmem:[#allocation7 + $0x8] sm:$0xf]
      %v2740 = vld [vmem:[#allocation7 + $0xc] sm:$0xf]
      %v2741 = vld [vmem:[#allocation7 + $0x10] sm:$0xf]
      %v2742 = vld [vmem:[#allocation7 + $0x14] sm:$0xf]
      %v2743 = vld [vmem:[#allocation7 + $0x18] sm:$0xf]
      %v2744 = vld [vmem:[#allocation7 + $0x1c] sm:$0xf]
      %v2745 = vld [vmem:[#allocation7 + $0x20] sm:$0xf]
      %v2746 = vld [vmem:[#allocation7 + $0x24] sm:$0xf]
      %v2747 = vld [vmem:[#allocation7 + $0x28] sm:$0xf]
      %v2748 = vld [vmem:[#allocation7 + $0x2c] sm:$0xf]
      %v2749 = vld [vmem:[#allocation7 + $0x30] sm:$0xf]
      %v2750 = vld [vmem:[#allocation7 + $0x34] sm:$0xf]
      %v2751 = vld [vmem:[#allocation7 + $0x38] sm:$0xf]
      %v2752 = vld [vmem:[#allocation7 + $0x3c] sm:$0xf]
      %v2753 = vld [vmem:[#allocation7 + $0x40] sm:$0xf]
      %v2754 = vld [vmem:[#allocation7 + $0x44] sm:$0xf]
      %v2755 = vld [vmem:[#allocation7 + $0x48] sm:$0xf]
      %v2756 = vld [vmem:[#allocation7 + $0x4c] sm:$0xf]
      %v2757 = vld [vmem:[#allocation7 + $0x50] sm:$0xf]
      %v2758 = vld [vmem:[#allocation7 + $0x54] sm:$0xf]
      %v2759 = vld [vmem:[#allocation7 + $0x58] sm:$0xf]
      %v2760 = vld [vmem:[#allocation7 + $0x5c] sm:$0xf]
      %v2761 = vld [vmem:[#allocation7 + $0x60] sm:$0xf]
      %v2762 = vld [vmem:[#allocation7 + $0x64] sm:$0xf]
      %v2763 = vld [vmem:[#allocation7 + $0x68] sm:$0xf]
      %v2764 = vld [vmem:[#allocation7 + $0x6c] sm:$0xf]
      %v2765 = vld [vmem:[#allocation7 + $0x70] sm:$0xf]
      %v2766 = vld [vmem:[#allocation7 + $0x74] sm:$0xf]
      %v2767 = vld [vmem:[#allocation7 + $0x78] sm:$0xf]
      %v2768 = vld [vmem:[#allocation7 + $0x7c] sm:$0xf]
      %v2769 = vld [vmem:[#allocation7 + $0x80] sm:$0xf]
      %v2770 = vld [vmem:[#allocation7 + $0x84] sm:$0xf]
      %v2771 = vld [vmem:[#allocation7 + $0x88] sm:$0xf]
      %v2772 = vld [vmem:[#allocation7 + $0x8c] sm:$0xf]
      %v2773 = vld [vmem:[#allocation7 + $0x90] sm:$0xf]
      %v2774 = vld [vmem:[#allocation7 + $0x94] sm:$0xf]
      %v2775 = vld [vmem:[#allocation7 + $0x98] sm:$0xf]
      %v2776 = vld [vmem:[#allocation7 + $0x9c] sm:$0xf]
      %v2777 = vld [vmem:[#allocation7 + $0xa0] sm:$0xf]
      %v2778 = vld [vmem:[#allocation7 + $0xa4] sm:$0xf]
      %v2779 = vld [vmem:[#allocation7 + $0xa8] sm:$0xf]
      %v2780 = vld [vmem:[#allocation7 + $0xac] sm:$0xf]
      %v2781 = vld [vmem:[#allocation7 + $0xb0] sm:$0xf]
      %v2782 = vld [vmem:[#allocation7 + $0xb4] sm:$0xf]
      %v2783 = vld [vmem:[#allocation7 + $0xb8] sm:$0xf]
      %v2784 = vld [vmem:[#allocation7 + $0xbc] sm:$0xf]
      %v2785 = vld [vmem:[#allocation7 + $0xc0] sm:$0xf]
      %v2786 = vld [vmem:[#allocation7 + $0xc4] sm:$0xf]
      %v2787 = vld [vmem:[#allocation7 + $0xc8] sm:$0xf]
      %v2788 = vld [vmem:[#allocation7 + $0xcc] sm:$0xf]
      %v2789 = vld [vmem:[#allocation7 + $0xd0] sm:$0xf]
      %v2790 = vld [vmem:[#allocation7 + $0xd4] sm:$0xf]
      %v2791 = vld [vmem:[#allocation7 + $0xd8] sm:$0xf]
      %v2792 = vld [vmem:[#allocation7 + $0xdc] sm:$0xf]
      %v2793 = vld [vmem:[#allocation7 + $0xe0] sm:$0xf]
      %v2794 = vld [vmem:[#allocation7 + $0xe4] sm:$0xf]
      %v2795 = vld [vmem:[#allocation7 + $0xe8] sm:$0xf]
      %v2796 = vld [vmem:[#allocation7 + $0xec] sm:$0xf]
      %v2797 = vld [vmem:[#allocation7 + $0xf0] sm:$0xf]
      %v2798 = vld [vmem:[#allocation7 + $0xf4] sm:$0xf]
      %v2799 = vld [vmem:[#allocation7 + $0xf8] sm:$0xf]
      %v2800 = vld [vmem:[#allocation7 + $0xfc] sm:$0xf]
      %v2801 = vld [vmem:[#allocation7 + $0x100] sm:$0xf]
      %v2802 = vld [vmem:[#allocation7 + $0x104] sm:$0xf]
      %v2803 = vld [vmem:[#allocation7 + $0x108] sm:$0xf]
      %v2804 = vld [vmem:[#allocation7 + $0x10c] sm:$0xf]
      %v2805 = vld [vmem:[#allocation7 + $0x110] sm:$0xf]
      %v2806 = vld [vmem:[#allocation7 + $0x114] sm:$0xf]
      %v2807 = vld [vmem:[#allocation7 + $0x118] sm:$0xf]
      %v2808 = vld [vmem:[#allocation7 + $0x11c] sm:$0xf]
      %v2809 = vld [vmem:[#allocation7 + $0x120] sm:$0xf]
      %v2810 = vld [vmem:[#allocation7 + $0x124] sm:$0xf]
      %v2811 = vld [vmem:[#allocation7 + $0x128] sm:$0xf]
      %v2812 = vld [vmem:[#allocation7 + $0x12c] sm:$0xf]
      %v2813 = vld [vmem:[#allocation7 + $0x130] sm:$0xf]
      %v2814 = vld [vmem:[#allocation7 + $0x134] sm:$0xf]
      %v2815 = vld [vmem:[#allocation7 + $0x138] sm:$0xf]
      %v2816 = vld [vmem:[#allocation7 + $0x13c] sm:$0xf]
      %v2817 = vld [vmem:[#allocation8] sm:$0x1]
      %v2819 = vlaneseq
      %v2820 = vshrl.u32 %v2819, 7
      %v2821 = vsub.s32 0, %v2820
      %v2822 = vrot.slane %v2817, %v2821
      %v2904 = vunpack.c.l.b16 %v2737
      %v2905 = vunpack.c.l.b16 %v2738
      %v2906 = vunpack.c.l.b16 %v2739
      %v2907 = vunpack.c.l.b16 %v2740
      %v2908 = vunpack.c.l.b16 %v2741
      %v2909 = vunpack.c.l.b16 %v2742
      %v2910 = vunpack.c.l.b16 %v2743
      %v2911 = vunpack.c.l.b16 %v2744
      %v2912 = vunpack.c.l.b16 %v2745
      %v2913 = vunpack.c.l.b16 %v2746
      %v2914 = vunpack.c.l.b16 %v2747
      %v2915 = vunpack.c.l.b16 %v2748
      %v2916 = vunpack.c.l.b16 %v2749
      %v2917 = vunpack.c.l.b16 %v2750
      %v2918 = vunpack.c.l.b16 %v2751
      %v2919 = vunpack.c.l.b16 %v2752
      %v2920 = vunpack.c.l.b16 %v2753
      %v2921 = vunpack.c.l.b16 %v2754
      %v2922 = vunpack.c.l.b16 %v2755
      %v2923 = vunpack.c.l.b16 %v2756
      %v2924 = vunpack.c.l.b16 %v2757
      %v2925 = vunpack.c.l.b16 %v2758
      %v2926 = vunpack.c.l.b16 %v2759
      %v2927 = vunpack.c.l.b16 %v2760
      %v2928 = vunpack.c.l.b16 %v2761
      %v2929 = vunpack.c.l.b16 %v2762
      %v2930 = vunpack.c.l.b16 %v2763
      %v2931 = vunpack.c.l.b16 %v2764
      %v2932 = vunpack.c.l.b16 %v2765
      %v2933 = vunpack.c.l.b16 %v2766
      %v2934 = vunpack.c.l.b16 %v2767
      %v2935 = vunpack.c.l.b16 %v2768
      %v2936 = vunpack.c.l.b16 %v2769
      %v2937 = vunpack.c.l.b16 %v2770
      %v2938 = vunpack.c.l.b16 %v2771
      %v2939 = vunpack.c.l.b16 %v2772
      %v2940 = vunpack.c.l.b16 %v2773
      %v2941 = vunpack.c.l.b16 %v2774
      %v2942 = vunpack.c.l.b16 %v2775
      %v2943 = vunpack.c.l.b16 %v2776
      %v2944 = vunpack.c.l.b16 %v2777
      %v2945 = vunpack.c.l.b16 %v2778
      %v2946 = vunpack.c.l.b16 %v2779
      %v2947 = vunpack.c.l.b16 %v2780
      %v2948 = vunpack.c.l.b16 %v2781
      %v2949 = vunpack.c.l.b16 %v2782
      %v2950 = vunpack.c.l.b16 %v2783
      %v2951 = vunpack.c.l.b16 %v2784
      %v2952 = vunpack.c.l.b16 %v2785
      %v2953 = vunpack.c.l.b16 %v2786
      %v2954 = vunpack.c.l.b16 %v2787
      %v2955 = vunpack.c.l.b16 %v2788
      %v2956 = vunpack.c.l.b16 %v2789
      %v2957 = vunpack.c.l.b16 %v2790
      %v2958 = vunpack.c.l.b16 %v2791
      %v2959 = vunpack.c.l.b16 %v2792
      %v2960 = vunpack.c.l.b16 %v2793
      %v2961 = vunpack.c.l.b16 %v2794
      %v2962 = vunpack.c.l.b16 %v2795
      %v2963 = vunpack.c.l.b16 %v2796
      %v2964 = vunpack.c.l.b16 %v2797
      %v2965 = vunpack.c.l.b16 %v2798
      %v2966 = vunpack.c.l.b16 %v2799
      %v2967 = vunpack.c.l.b16 %v2800
      %v2968 = vunpack.c.l.b16 %v2801
      %v2969 = vunpack.c.l.b16 %v2802
      %v2970 = vunpack.c.l.b16 %v2803
      %v2971 = vunpack.c.l.b16 %v2804
      %v2972 = vunpack.c.l.b16 %v2805
      %v2973 = vunpack.c.l.b16 %v2806
      %v2974 = vunpack.c.l.b16 %v2807
      %v2975 = vunpack.c.l.b16 %v2808
      %v2976 = vunpack.c.l.b16 %v2809
      %v2977 = vunpack.c.l.b16 %v2810
      %v2978 = vunpack.c.l.b16 %v2811
      %v2979 = vunpack.c.l.b16 %v2812
      %v2980 = vunpack.c.l.b16 %v2813
      %v2981 = vunpack.c.l.b16 %v2814
      %v2982 = vunpack.c.l.b16 %v2815
      %v2983 = vunpack.c.l.b16 %v2816
      %v2984 = vpack.c.b16 %v2905, %v2904
      %v2985 = vpack.c.b16 %v2907, %v2906
      %v2986 = vpack.c.b16 %v2909, %v2908
      %v2987 = vpack.c.b16 %v2911, %v2910
      %v2988 = vpack.c.b16 %v2913, %v2912
      %v2989 = vpack.c.b16 %v2915, %v2914
      %v2990 = vpack.c.b16 %v2917, %v2916
      %v2991 = vpack.c.b16 %v2919, %v2918
      %v2992 = vpack.c.b16 %v2921, %v2920
      %v2993 = vpack.c.b16 %v2923, %v2922
      %v2994 = vpack.c.b16 %v2925, %v2924
      %v2995 = vpack.c.b16 %v2927, %v2926
      %v2996 = vpack.c.b16 %v2929, %v2928
      %v2997 = vpack.c.b16 %v2931, %v2930
      %v2998 = vpack.c.b16 %v2933, %v2932
      %v2999 = vpack.c.b16 %v2935, %v2934
      %v3000 = vpack.c.b16 %v2937, %v2936
      %v3001 = vpack.c.b16 %v2939, %v2938
      %v3002 = vpack.c.b16 %v2941, %v2940
      %v3003 = vpack.c.b16 %v2943, %v2942
      %v3004 = vpack.c.b16 %v2945, %v2944
      %v3005 = vpack.c.b16 %v2947, %v2946
      %v3006 = vpack.c.b16 %v2949, %v2948
      %v3007 = vpack.c.b16 %v2951, %v2950
      %v3008 = vpack.c.b16 %v2953, %v2952
      %v3009 = vpack.c.b16 %v2955, %v2954
      %v3010 = vpack.c.b16 %v2957, %v2956
      %v3011 = vpack.c.b16 %v2959, %v2958
      %v3012 = vpack.c.b16 %v2961, %v2960
      %v3013 = vpack.c.b16 %v2963, %v2962
      %v3014 = vpack.c.b16 %v2965, %v2964
      %v3015 = vpack.c.b16 %v2967, %v2966
      %v3016 = vpack.c.b16 %v2969, %v2968
      %v3017 = vpack.c.b16 %v2971, %v2970
      %v3018 = vpack.c.b16 %v2973, %v2972
      %v3019 = vpack.c.b16 %v2975, %v2974
      %v3020 = vpack.c.b16 %v2977, %v2976
      %v3021 = vpack.c.b16 %v2979, %v2978
      %v3022 = vpack.c.b16 %v2981, %v2980
      %v3023 = vpack.c.b16 %v2983, %v2982
      %3064 = vmatprep.subr.bf16.mxu0 0
      %3065 = vmatpush1.bf16.msra.mxu0 %v2991
      %3066 = vmatprep.subr.bf16.mxu0 0
      %3067 = vmatpush1.bf16.msra.mxu0 %v2990
      %3068 = vmatprep.subr.bf16.mxu0 0
      %3069 = vmatpush1.bf16.msra.mxu0 %v2989
      %3070 = vmatprep.subr.bf16.mxu0 0
      %3071 = vmatpush1.bf16.msra.mxu0 %v2988
      %3072 = vmatprep.subr.bf16.mxu0 0
      %3073 = vmatpush1.bf16.msra.mxu0 %v2987
      %3074 = vmatprep.subr.bf16.mxu0 0
      %3075 = vmatpush1.bf16.msra.mxu0 %v2986
      %3076 = vmatprep.subr.bf16.mxu0 0
      %3077 = vmatpush1.bf16.msra.mxu0 %v2985
      %3078 = vmatprep.subr.bf16.mxu0 0
      %3079 = vmatpush1.bf16.msra.mxu0 %v2984
      %3080 = vmatprep.subr.bf16.mxu0 0
      %3081 = vmatpush2.bf16.msra.mxu0 %v2999
      %3082 = vmatprep.subr.bf16.mxu0 0
      %3083 = vmatpush2.bf16.msra.mxu0 %v2998
      %3084 = vmatprep.subr.bf16.mxu0 0
      %3085 = vmatpush2.bf16.msra.mxu0 %v2997
      %3086 = vmatprep.subr.bf16.mxu0 0
      %3087 = vmatpush2.bf16.msra.mxu0 %v2996
      %3088 = vmatprep.subr.bf16.mxu0 0
      %3089 = vmatpush2.bf16.msra.mxu0 %v2995
      %3090 = vmatprep.subr.bf16.mxu0 0
      %3091 = vmatpush2.bf16.msra.mxu0 %v2994
      %3092 = vmatprep.subr.bf16.mxu0 0
      %3093 = vmatpush2.bf16.msra.mxu0 %v2993
      %3094 = vmatprep.subr.bf16.mxu0 0
      %3095 = vmatpush2.bf16.msra.mxu0 %v2992
      %3096 = vmatprep.mubr.bf16.mxu0 %v2733
      %3097 = vmatmul.mubr.bf16.gmra.mxu0 %v2732
      %v3098 = vpop.f32.mrf.mxu0
      %v3099 = vadd.f32 %v2822, %v3098
      %v3100 = vpop.f32.mrf.mxu0
      %v3101 = vpop.f32.mrf.mxu0
      %v3102 = vadd.f32 %v2822, %v3101
      %v3103 = vpop.f32.mrf.mxu0
      %3104 = vdwg.mxu0
      %3105 = vmatprep.subr.bf16.mxu0 0
      %3106 = vmatpush1.bf16.msra.mxu0 %v3007
      %3107 = vmatprep.subr.bf16.mxu0 0
      %3108 = vmatpush1.bf16.msra.mxu0 %v3006
      %3109 = vmatprep.subr.bf16.mxu0 0
      %3110 = vmatpush1.bf16.msra.mxu0 %v3005
      %3111 = vmatprep.subr.bf16.mxu0 0
      %3112 = vmatpush1.bf16.msra.mxu0 %v3004
      %3113 = vmatprep.subr.bf16.mxu0 0
      %3114 = vmatpush1.bf16.msra.mxu0 %v3003
      %3115 = vmatprep.subr.bf16.mxu0 0
      %3116 = vmatpush1.bf16.msra.mxu0 %v3002
      %3117 = vmatprep.subr.bf16.mxu0 0
      %3118 = vmatpush1.bf16.msra.mxu0 %v3001
      %3119 = vmatprep.subr.bf16.mxu0 0
      %3120 = vmatpush1.bf16.msra.mxu0 %v3000
      %3121 = vmatprep.subr.bf16.mxu0 0
      %3122 = vmatpush2.bf16.msra.mxu0 %v3015
      %3123 = vmatprep.subr.bf16.mxu0 0
      %3124 = vmatpush2.bf16.msra.mxu0 %v3014
      %3125 = vmatprep.subr.bf16.mxu0 0
      %3126 = vmatpush2.bf16.msra.mxu0 %v3013
      %3127 = vmatprep.subr.bf16.mxu0 0
      %3128 = vmatpush2.bf16.msra.mxu0 %v3012
      %3129 = vmatprep.subr.bf16.mxu0 0
      %3130 = vmatpush2.bf16.msra.mxu0 %v3011
      %3131 = vmatprep.subr.bf16.mxu0 0
      %3132 = vmatpush2.bf16.msra.mxu0 %v3010
      %3133 = vmatprep.subr.bf16.mxu0 0
      %3134 = vmatpush2.bf16.msra.mxu0 %v3009
      %3135 = vmatprep.subr.bf16.mxu0 0
      %3136 = vmatpush2.bf16.msra.mxu0 %v3008
      %3137 = vmatprep.mubr.bf16.mxu0 %v2735
      %3138 = vmatmul.mubr.bf16.gmra.mxu0 %v2734
      %v3139 = vpop.f32.mrf.mxu0
      %v3140 = vadd.f32 %v3099, %v3139
      %v3141 = vpop.f32.mrf.mxu0
      %v3142 = vpop.f32.mrf.mxu0
      %v3143 = vadd.f32 %v3102, %v3142
      %v3144 = vpop.f32.mrf.mxu0
      %3145 = vdwg.mxu0
      %3146 = vmatprep.subr.bf16.mxu0 0
      %3147 = vmatpush1.bf16.msra.mxu0 %v3023
      %3148 = vmatprep.subr.bf16.mxu0 0
      %3149 = vmatpush1.bf16.msra.mxu0 %v3022
      %3150 = vmatprep.subr.bf16.mxu0 0
      %3151 = vmatpush1.bf16.msra.mxu0 %v3021
      %3152 = vmatprep.subr.bf16.mxu0 0
      %3153 = vmatpush1.bf16.msra.mxu0 %v3020
      %3154 = vmatprep.subr.bf16.mxu0 0
      %3155 = vmatpush1.bf16.msra.mxu0 %v3019
      %3156 = vmatprep.subr.bf16.mxu0 0
      %3157 = vmatpush1.bf16.msra.mxu0 %v3018
      %3158 = vmatprep.subr.bf16.mxu0 0
      %3159 = vmatpush1.bf16.msra.mxu0 %v3017
      %3160 = vmatprep.subr.bf16.mxu0 0
      %3161 = vmatpush1.bf16.msra.mxu0 %v3016
      %3162 = vmatprep.subr.bf16.mxu0 0
      %3163 = vmatpush2.bf16.msra.mxu0 0
      %3164 = vmatprep.subr.bf16.mxu0 0
      %3165 = vmatpush2.bf16.msra.mxu0 0
      %3166 = vmatprep.subr.bf16.mxu0 0
      %3167 = vmatpush2.bf16.msra.mxu0 0
      %3168 = vmatprep.subr.bf16.mxu0 0
      %3169 = vmatpush2.bf16.msra.mxu0 0
      %3170 = vmatprep.subr.bf16.mxu0 0
      %3171 = vmatpush2.bf16.msra.mxu0 0
      %3172 = vmatprep.subr.bf16.mxu0 0
      %3173 = vmatpush2.bf16.msra.mxu0 0
      %3174 = vmatprep.subr.bf16.mxu0 0
      %3175 = vmatpush2.bf16.msra.mxu0 0
      %3176 = vmatprep.subr.bf16.mxu0 0
      %3177 = vmatpush2.bf16.msra.mxu0 0
      %3178 = vmatprep.mubr.bf16.mxu0 0
      %3179 = vmatmul.mubr.bf16.gmra.mxu0 %v2736
      %v3180 = vpop.f32.mrf.mxu0
      %v3181 = vadd.f32 %v3140, %v3180
      %v3182 = vpop.f32.mrf.mxu0
      %v3183 = vpop.f32.mrf.mxu0
      %v3184 = vadd.f32 %v3143, %v3183
      %v3185 = vpop.f32.mrf.mxu0
      %3186 = vdwg.mxu0
      %v3187 = vxor.u32 %v3181, 2147483648
      %v3188 = vxor.u32 %v3184, 2147483648
      %v3189 = vmul.f32 %v3187, 1.442695
      %v3190 = vpow.pop %v3189
      %v3191 = vmul.f32 %v3188, 1.442695
      %v3192 = vpow.pop %v3191
      %v3193 = vadd.f32 %v3190, 1.0
      %v3194 = vadd.f32 %v3192, 1.0
      %v3195 = vrcp.pop %v3193
      %v3196 = vmul.f32 1.0, %v3195
      %v3197 = vrcp.pop %v3194
      %v3198 = vmul.f32 1.0, %v3197
      %3199 = vst [vmem:[%s4] sm:$0xff] %v3196
      %3200 = vst [vmem:[%s4 + $0x8] sm:$0xff] %v3198
    $region41: #{finetune_panns_forward.1} parent=1 // pred_fallthru
      _
    // Predicated region
    $region42: #{finetune_panns_forward.1} parent=1 // pred_check
      _
    $region43: #{finetune_panns_forward.1} parent=1 // pred_check_branch
      %3202 = sbr.rel (0) target = $region45
    $region44: #{finetune_panns_forward.1} parent=1 // pred_region
      _
    $region45: #{finetune_panns_forward.1} parent=1 // pred_fallthru
      _
    // Predicated region
    $region46: #{finetune_panns_forward.1} parent=1 // pred_check
      _
    $region47: #{finetune_panns_forward.1} parent=1 // pred_check_branch
      %3204 = sbr.rel (0) target = $region49
    $region48: #{finetune_panns_forward.1} parent=1 // pred_region
      _
    $region49: #{finetune_panns_forward.1} parent=1 // pred_fallthru
      _
    %3205 = vsyncpa [#allocation4], 1
    %3206 = vsyncpa [#allocation6], 1
    %3207 = vsyncpa [#allocation9], 1

</llo_original>
